<compile_context>
chip_gen: v7x
topology: tpu7x:2x2x1
jax: 0.10.0
libtpu: 0.0.40
codegen_flags: <defaults>
</compile_context>

<pallas_src>
import functools

import jax
import jax.numpy as jnp
from jax import lax
from jax.experimental import pallas as pl
from jax.experimental.pallas import tpu as pltpu


# ----------------------------- fused block kernel --------------------------- #

def _block_kernel(x_q_ref, x_kv_ref, wq_ref, wk_ref, wv_ref, wo_ref,
                  win_ref, bin_ref, wout_ref, bout_ref, out_ref,
                  *, num_heads, act_type):
    # x_q_ref : (1, Tq, D)  query-tile slab of the residual stream
    # x_kv_ref: (1, P,  D)  full-sequence slab (for K/V)
    # wq/wk/wv_ref: (D, H*Dh)   fused-head projections (MXU dtype)
    # wo_ref  : (H*Dh, D)       fused output projection (MXU dtype)
    # win_ref : (D, M)  bin_ref: (1, M)  wout_ref: (M, D)  bout_ref: (1, D)
    # out_ref : (1, Tq, D)   x + attn(x) + mlp(x + attn(x))
    mxu = wq_ref.dtype
    tq = x_q_ref.shape[1]
    p = x_kv_ref.shape[1]
    d_model = x_q_ref.shape[2]
    hdh = wq_ref.shape[1]
    d_head = hdh // num_heads
    d_mlp = win_ref.shape[1]
    scale = jnp.float32(1.0 / (d_head ** 0.5))

    x_q = x_q_ref[0]
    x_q_m = x_q.astype(mxu)
    x_kv_m = x_kv_ref[0].astype(mxu)

    # Fused-head projections: one wide matmul each (lane dim = H*Dh).
    q = jnp.dot(x_q_m, wq_ref[...], preferred_element_type=jnp.float32)   # (Tq, H*Dh)
    k = jnp.dot(x_kv_m, wk_ref[...], preferred_element_type=jnp.float32)  # (P,  H*Dh)
    v = jnp.dot(x_kv_m, wv_ref[...], preferred_element_type=jnp.float32)  # (P,  H*Dh)

    # Causal mask for this query tile (global query index = tile offset + row).
    q0 = pl.program_id(1) * tq
    q_idx = q0 + lax.broadcasted_iota(jnp.int32, (tq, p), 0)
    k_idx = lax.broadcasted_iota(jnp.int32, (tq, p), 1)
    causal = k_idx <= q_idx

    # Per-head score/softmax/value-mix (scores (Tq, P) are lane-dense); per-head
    # z slices are concatenated so W_O is applied as a single wide matmul.
    z_heads = []
    for h in range(num_heads):                       # static unroll, H is small
        lo, hi = h * d_head, (h + 1) * d_head
        q_h = q[:, lo:hi].astype(mxu)
        k_h = k[:, lo:hi].astype(mxu)
        v_h = v[:, lo:hi].astype(mxu)
        s = lax.dot_general(q_h, k_h, (((1,), (1,)), ((), ())),
                            preferred_element_type=jnp.float32)           # (Tq, P)
        # tril(scores) - 1e10*(1 - mask), then /sqrt(d_head)  (matches reference)
        s = jnp.where(causal, s, jnp.float32(-1e10)) * scale
        m = jnp.max(s, axis=-1, keepdims=True)
        e = jnp.exp(s - m)
        attn = e / jnp.sum(e, axis=-1, keepdims=True)                     # f32
        z_heads.append(jnp.dot(attn.astype(mxu), v_h,
                               preferred_element_type=jnp.float32))       # (Tq, Dh)
    z = jnp.concatenate(z_heads, axis=-1)                                 # (Tq, H*Dh)

    attn_out = jnp.dot(z.astype(mxu), wo_ref[...],
                       preferred_element_type=jnp.float32)                # (Tq, D)
    resid_mid = x_q.astype(jnp.float32) + attn_out                        # f32 residual

    # ---- MLP + residual, fused (resid_mid never leaves VMEM) ----
    mlp_in = resid_mid.astype(mxu)
    chunk = d_mlp if (d_mlp <= 512 or d_mlp % 512 != 0) else 512
    y = jnp.zeros((tq, d_model), jnp.float32)
    for m0 in range(0, d_mlp, chunk):                # static unroll
        w_in_c = win_ref[:, m0:m0 + chunk]           # (D, chunk)
        b_in_c = bin_ref[:, m0:m0 + chunk]           # (1, chunk)
        h_pre = jnp.dot(mlp_in, w_in_c,
                        preferred_element_type=jnp.float32) + b_in_c      # (Tq, chunk)
        if act_type == "ReLU":
            h_act = jnp.maximum(h_pre, 0.0)
        elif act_type == "GeLU":
            # tanh approximation -> EUP slot (|err| < ~1e-3 vs exact erf GELU)
            # TODO(synk): switch to exact-erf GELU if strict parity is required.
            c0 = 0.7978845608028654      # sqrt(2/pi)
            h_act = 0.5 * h_pre * (1.0 + jnp.tanh(
                c0 * (h_pre + 0.044715 * h_pre * h_pre * h_pre)))
        else:
            raise NotImplementedError(f"act_type {act_type} not supported")
        y = y + jnp.dot(h_act.astype(mxu), wout_ref[m0:m0 + chunk, :],
                        preferred_element_type=jnp.float32)               # (Tq, D)
    y = y + bout_ref[...]

    out_ref[0] = (resid_mid + y).astype(out_ref.dtype)


# ----------------------------- wrapper -------------------------------------- #

def transformer_block_forward(x, W_Q, W_K, W_V, W_O, W_in, b_in, W_out, b_out,
                              *, act_type="ReLU", mxu_dtype=jnp.bfloat16,
                              q_tile=128):
    """x: (batch, pos, d_model); weights laid out as in the PyTorch module.
    Returns x + attn(x) + mlp(x + attn(x)),  shape (batch, pos, d_model)."""
    if act_type not in ("ReLU", "GeLU"):
        # TODO(synk): SoLU (softmax gating + LayerNorm over d_mlp) not implemented.
        raise NotImplementedError(
            f"act_type {act_type!r} is not supported by the Pallas kernel")

    B, P, D = x.shape
    H, Dh, _ = W_Q.shape
    M, _ = W_in.shape
    HDh = H * Dh

    # Fused-head, pre-transposed, MXU-dtype weights (one-time glue; hoist for
    # repeated calls).  Column index of the fused matrices is head-major
    # (head * d_head + h), matching rearrange(z, 'b i q h -> b q (i h)').
    wq_t = jnp.transpose(W_Q, (2, 0, 1)).reshape(D, HDh).astype(mxu_dtype)
    wk_t = jnp.transpose(W_K, (2, 0, 1)).reshape(D, HDh).astype(mxu_dtype)
    wv_t = jnp.transpose(W_V, (2, 0, 1)).reshape(D, HDh).astype(mxu_dtype)
    wo_t = W_O.T.astype(mxu_dtype)                    # (H*Dh, D)
    win_t = W_in.T.astype(mxu_dtype)                  # (D, M)
    wout_t = W_out.T.astype(mxu_dtype)                # (M, D)
    b_in2 = b_in.reshape(1, M).astype(jnp.float32)
    b_out2 = b_out.reshape(1, D).astype(jnp.float32)

    # Query-block tiling: bounds the (Tq, P) score matrix and adds grid points.
    tile_q = q_tile if (P > q_tile and P % q_tile == 0) else P
    grid = (B, P // tile_q)

    # Explicit scoped-VMEM budget with headroom (weight blocks are
    # double-buffered by the pipeline even though their index_map is constant).
    w_bytes = ((3 * D * HDh + HDh * D + D * M + M * D)
               * jnp.dtype(mxu_dtype).itemsize + (M + D) * 4)
    blk_bytes = (2 * tile_q * D + P * D) * x.dtype.itemsize
    vmem_limit = int(min(max(2 * (w_bytes + blk_bytes) + (4 << 20), 32 << 20),
                         64 << 20))

    kernel = functools.partial(_block_kernel, num_heads=H, act_type=act_type)
    out = pl.pallas_call(
        kernel,
        out_shape=jax.ShapeDtypeStruct((B, P, D), x.dtype),
        grid_spec=pltpu.PrefetchScalarGridSpec(
            num_scalar_prefetch=0,
            grid=grid,
            in_specs=[
                pl.BlockSpec((1, tile_q, D), lambda b, t: (b, t, 0)),  # x (queries)
                pl.BlockSpec((1, P, D), lambda b, t: (b, 0, 0)),       # x (keys/values)
                pl.BlockSpec((D, HDh), lambda b, t: (0, 0)),           # W_Q fused
                pl.BlockSpec((D, HDh), lambda b, t: (0, 0)),           # W_K fused
                pl.BlockSpec((D, HDh), lambda b, t: (0, 0)),           # W_V fused
                pl.BlockSpec((HDh, D), lambda b, t: (0, 0)),           # W_O
                pl.BlockSpec((D, M), lambda b, t: (0, 0)),             # W_in^T
                pl.BlockSpec((1, M), lambda b, t: (0, 0)),             # b_in
                pl.BlockSpec((M, D), lambda b, t: (0, 0)),             # W_out^T
                pl.BlockSpec((1, D), lambda b, t: (0, 0)),             # b_out
            ],
            out_specs=pl.BlockSpec((1, tile_q, D), lambda b, t: (b, t, 0)),
        ),
        compiler_params=pltpu.CompilerParams(
            dimension_semantics=("parallel", "parallel"),
            vmem_limit_bytes=vmem_limit),
    )(x, x, wq_t, wk_t, wv_t, wo_t, win_t, b_in2, wout_t, b_out2)
    return out


# ----------------------------- reference ------------------------------------ #

def _reference_block(x, W_Q, W_K, W_V, W_O, W_in, b_in, W_out, b_out,
                     act_type, mxu_dtype=jnp.float32):
    """Pure-JAX reference.  `mxu_dtype` mirrors the kernel's operand casts so
    the bf16 path can be checked tightly; float32 gives the exact module math."""
    B, P, D = x.shape
    H, Dh, _ = W_Q.shape
    f32 = jnp.float32
    c = lambda a: a.astype(mxu_dtype)
    k = jnp.einsum('ihd,bpd->biph', c(W_K), c(x), preferred_element_type=f32)
    q = jnp.einsum('ihd,bpd->biph', c(W_Q), c(x), preferred_element_type=f32)
    v = jnp.einsum('ihd,bpd->biph', c(W_V), c(x), preferred_element_type=f32)
    scores = jnp.einsum('biph,biqh->biqp', c(k), c(q), preferred_element_type=f32)
    mask = jnp.tril(jnp.ones((P, P), f32))
    masked = scores * mask - 1e10 * (1.0 - mask)
    attn = jax.nn.softmax(masked / jnp.sqrt(jnp.float32(Dh)), axis=-1)
    z = jnp.einsum('biph,biqp->biqh', c(v), c(attn), preferred_element_type=f32)
    z_flat = jnp.transpose(z, (0, 2, 1, 3)).reshape(B, P, H * Dh)
    attn_out = jnp.einsum('df,bqf->bqd', c(W_O), c(z_flat), preferred_element_type=f32)
    x1 = x.astype(f32) + attn_out
    h = jnp.einsum('md,bpd->bpm', c(W_in), c(x1), preferred_element_type=f32) + b_in
    if act_type == "ReLU":
        h = jnp.maximum(h, 0.0)
    elif act_type == "GeLU":
        h = 0.5 * h * (1.0 + lax.erf(h / jnp.sqrt(jnp.float32(2.0))))  # exact GELU
    mlp_out = jnp.einsum('dm,bpm->bpd', c(W_out), c(h), preferred_element_type=f32) + b_out
    return x1 + mlp_out


# ------------------------------- main ---------------------------------------- #

if __name__ == "__main__":
    # Small deterministic shapes consistent with the module.
    d_model, d_mlp, d_head, num_heads = 32, 128, 8, 4
    batch = 2

    key = jax.random.PRNGKey(0)
    ks = jax.random.split(key, 9)
    sd = 1.0 / (d_model ** 0.5)

    W_Q = jax.random.normal(ks[0], (num_heads, d_head, d_model), jnp.float32) * sd
    W_K = jax.random.normal(ks[1], (num_heads, d_head, d_model), jnp.float32) * sd
    W_V = jax.random.normal(ks[2], (num_heads, d_head, d_model), jnp.float32) * sd
    W_O = jax.random.normal(ks[3], (d_model, d_head * num_heads), jnp.float32) * sd
    W_in = jax.random.normal(ks[4], (d_mlp, d_model), jnp.float32) * sd
    b_in = jax.random.normal(ks[5], (d_mlp,), jnp.float32) * 0.02
    W_out = jax.random.normal(ks[6], (d_model, d_mlp), jnp.float32) * sd
    b_out = jax.random.normal(ks[7], (d_model,), jnp.float32) * 0.02
    weights = (W_Q, W_K, W_V, W_O, W_in, b_in, W_out, b_out)

    def run_check(x, act_type, mxu_dtype, atol, rtol, label):
        out = transformer_block_forward(x, *weights, act_type=act_type,
                                        mxu_dtype=mxu_dtype)
        out = jax.block_until_ready(out)
        with jax.default_matmul_precision("highest"):
            ref = _reference_block(x, *weights, act_type=act_type,
                                   mxu_dtype=mxu_dtype)
        ref = jax.block_until_ready(ref)
        assert out.shape == x.shape, (label, out.shape)
        max_diff = float(jnp.max(jnp.abs(out - ref)))
        assert jnp.allclose(out, ref, atol=atol, rtol=rtol), (
            f"{label}: mismatch vs reference; max abs diff = {max_diff}")

    # pos=8: n_ctx-sized toy sequence (single query tile).
    x_short = jax.random.normal(ks[8], (batch, 8, d_model), jnp.float32)
    # pos=256: exercises the query-block tiling path (Tq=128 -> 2 tiles).
    x_long = jax.random.normal(jax.random.PRNGKey(1), (batch, 256, d_model),
                               jnp.float32)

    # 1) f32 MXU path vs full-precision reference (tight structural check).
    run_check(x_short, "ReLU", jnp.float32, 2e-2, 2e-2, "f32 / pos=8")
    # 2) bf16 MXU path (default perf config) vs bf16-cast reference.
    run_check(x_short, "ReLU", jnp.bfloat16, 2e-2, 2e-2, "bf16 / pos=8")
    # 3) Query-tiled path + GeLU, bf16.
    run_check(x_long, "GeLU", jnp.bfloat16, 2e-2, 2e-2, "bf16 / pos=256 / GeLU")

    print("KERNEL_OK")
</pallas_src>

<mosaic_0001>
module attributes {stable_mosaic.version = 11 : i64} {
  func.func @_block_kernel(%arg0: i32, %arg1: i32, %arg2: memref<1x8x32xf32, #tpu.memory_space<vmem>>, %arg3: memref<1x8x32xf32, #tpu.memory_space<vmem>>, %arg4: memref<32x32xf32, #tpu.memory_space<vmem>>, %arg5: memref<32x32xf32, #tpu.memory_space<vmem>>, %arg6: memref<32x32xf32, #tpu.memory_space<vmem>>, %arg7: memref<32x32xf32, #tpu.memory_space<vmem>>, %arg8: memref<32x128xf32, #tpu.memory_space<vmem>>, %arg9: memref<1x128xf32, #tpu.memory_space<vmem>>, %arg10: memref<128x32xf32, #tpu.memory_space<vmem>>, %arg11: memref<1x32xf32, #tpu.memory_space<vmem>>, %arg12: memref<1x8x32xf32, #tpu.memory_space<vmem>>) attributes {dimension_semantics = [#tpu.dimension_semantics<parallel>, #tpu.dimension_semantics<parallel>], iteration_bounds = array<i64: 2, 1>, scalar_prefetch = 0 : i64, scratch_operands = 0 : i64, tpu.core_type = #tpu.core_type<tc>, window_params = [{transform_indices = @transform_0, window_bounds = array<i64: 1, 8, 32>}, {transform_indices = @transform_1, window_bounds = array<i64: 1, 8, 32>}, {pipeline_mode = #tpu.pipeline_mode<synchronous>, transform_indices = @transform_2, window_bounds = array<i64: 32, 32>}, {pipeline_mode = #tpu.pipeline_mode<synchronous>, transform_indices = @transform_3, window_bounds = array<i64: 32, 32>}, {pipeline_mode = #tpu.pipeline_mode<synchronous>, transform_indices = @transform_4, window_bounds = array<i64: 32, 32>}, {pipeline_mode = #tpu.pipeline_mode<synchronous>, transform_indices = @transform_5, window_bounds = array<i64: 32, 32>}, {pipeline_mode = #tpu.pipeline_mode<synchronous>, transform_indices = @transform_6, window_bounds = array<i64: 32, 128>}, {pipeline_mode = #tpu.pipeline_mode<synchronous>, transform_indices = @transform_7, window_bounds = array<i64: 1, 128>}, {pipeline_mode = #tpu.pipeline_mode<synchronous>, transform_indices = @transform_8, window_bounds = array<i64: 128, 32>}, {pipeline_mode = #tpu.pipeline_mode<synchronous>, transform_indices = @transform_9, window_bounds = array<i64: 1, 32>}, {transform_indices = @transform_10, window_bounds = array<i64: 1, 8, 32>}]} {
    %c0 = arith.constant 0 : index
    %c0_0 = arith.constant 0 : index
    %c0_1 = arith.constant 0 : index
    %0 = vector.load %arg2[%c0, %c0_0, %c0_1] : memref<1x8x32xf32, #tpu.memory_space<vmem>>, vector<1x8x32xf32>
    %1 = vector.shape_cast %0 : vector<1x8x32xf32> to vector<8x32xf32>
    %c0_2 = arith.constant 0 : index
    %c0_3 = arith.constant 0 : index
    %c0_4 = arith.constant 0 : index
    %2 = vector.load %arg3[%c0_2, %c0_3, %c0_4] : memref<1x8x32xf32, #tpu.memory_space<vmem>>, vector<1x8x32xf32>
    %3 = vector.shape_cast %2 : vector<1x8x32xf32> to vector<8x32xf32>
    %c0_5 = arith.constant 0 : index
    %c0_6 = arith.constant 0 : index
    %4 = vector.load %arg4[%c0_5, %c0_6] : memref<32x32xf32, #tpu.memory_space<vmem>>, vector<32x32xf32>
    %cst = arith.constant dense<0.000000e+00> : vector<8x32xf32>
    %5 = tpu.matmul %1, %4, %cst {dimension_numbers = #tpu.dot_dimension_numbers<[1], [0], [0], [1], [0, 0, 1, 1], [], []>} : vector<8x32xf32>, vector<32x32xf32>, vector<8x32xf32> -> vector<8x32xf32>
    %c0_7 = arith.constant 0 : index
    %c0_8 = arith.constant 0 : index
    %6 = vector.load %arg5[%c0_7, %c0_8] : memref<32x32xf32, #tpu.memory_space<vmem>>, vector<32x32xf32>
    %cst_9 = arith.constant dense<0.000000e+00> : vector<8x32xf32>
    %7 = tpu.matmul %3, %6, %cst_9 {dimension_numbers = #tpu.dot_dimension_numbers<[1], [0], [0], [1], [0, 0, 1, 1], [], []>} : vector<8x32xf32>, vector<32x32xf32>, vector<8x32xf32> -> vector<8x32xf32>
    %c0_10 = arith.constant 0 : index
    %c0_11 = arith.constant 0 : index
    %8 = vector.load %arg6[%c0_10, %c0_11] : memref<32x32xf32, #tpu.memory_space<vmem>>, vector<32x32xf32>
    %cst_12 = arith.constant dense<0.000000e+00> : vector<8x32xf32>
    %9 = tpu.matmul %3, %8, %cst_12 {dimension_numbers = #tpu.dot_dimension_numbers<[1], [0], [0], [1], [0, 0, 1, 1], [], []>} : vector<8x32xf32>, vector<32x32xf32>, vector<8x32xf32> -> vector<8x32xf32>
    %c8_i32 = arith.constant 8 : i32
    %10 = arith.muli %arg1, %c8_i32 : i32
    %11 = tpu.iota {dimensions = array<i32: 0>} : vector<8x8xi32>
    %12 = vector.broadcast %10 : i32 to vector<8x8xi32>
    %13 = arith.addi %12, %11 : vector<8x8xi32>
    %14 = tpu.iota {dimensions = array<i32: 1>} : vector<8x8xi32>
    %15 = arith.cmpi sle, %14, %13 : vector<8x8xi32>
    %16 = vector.extract_strided_slice %5 {offsets = [0, 0], sizes = [8, 8], strides = [1, 1]} : vector<8x32xf32> to vector<8x8xf32>
    %17 = vector.extract_strided_slice %7 {offsets = [0, 0], sizes = [8, 8], strides = [1, 1]} : vector<8x32xf32> to vector<8x8xf32>
    %18 = vector.extract_strided_slice %9 {offsets = [0, 0], sizes = [8, 8], strides = [1, 1]} : vector<8x32xf32> to vector<8x8xf32>
    %cst_13 = arith.constant dense<0.000000e+00> : vector<8x8xf32>
    %19 = tpu.matmul %16, %17, %cst_13 {dimension_numbers = #tpu.dot_dimension_numbers<[1], [1], [0], [0], [0, 0, 1, 0], [], []>} : vector<8x8xf32>, vector<8x8xf32>, vector<8x8xf32> -> vector<8x8xf32>
    %cst_14 = arith.constant -1.000000e+10 : f32
    %20 = vector.broadcast %cst_14 : f32 to vector<8x8xf32>
    %21 = arith.select %15, %19, %20 : vector<8x8xi1>, vector<8x8xf32>
    %cst_15 = arith.constant 0.353553385 : f32
    %22 = vector.broadcast %cst_15 : f32 to vector<8x8xf32>
    %23 = arith.mulf %21, %22 : vector<8x8xf32>
    %cst_16 = arith.constant dense<0xFF800000> : vector<8xf32>
    %24 = vector.multi_reduction <maximumf>, %23, %cst_16 [1] : vector<8x8xf32> to vector<8xf32>
    %25 = vector.shape_cast %24 : vector<8xf32> to vector<8x1xf32>
    %26 = vector.broadcast %25 : vector<8x1xf32> to vector<8x8xf32>
    %27 = arith.subf %23, %26 : vector<8x8xf32>
    %28 = math.exp %27 : vector<8x8xf32>
    %cst_17 = arith.constant dense<0.000000e+00> : vector<8xf32>
    %29 = vector.multi_reduction <add>, %28, %cst_17 [1] : vector<8x8xf32> to vector<8xf32>
    %30 = vector.shape_cast %29 : vector<8xf32> to vector<8x1xf32>
    %31 = vector.broadcast %30 : vector<8x1xf32> to vector<8x8xf32>
    %32 = arith.divf %28, %31 : vector<8x8xf32>
    %cst_18 = arith.constant dense<0.000000e+00> : vector<8x8xf32>
    %33 = tpu.matmul %32, %18, %cst_18 {dimension_numbers = #tpu.dot_dimension_numbers<[1], [0], [0], [1], [0, 0, 1, 1], [], []>} : vector<8x8xf32>, vector<8x8xf32>, vector<8x8xf32> -> vector<8x8xf32>
    %34 = vector.extract_strided_slice %5 {offsets = [0, 8], sizes = [8, 8], strides = [1, 1]} : vector<8x32xf32> to vector<8x8xf32>
    %35 = vector.extract_strided_slice %7 {offsets = [0, 8], sizes = [8, 8], strides = [1, 1]} : vector<8x32xf32> to vector<8x8xf32>
    %36 = vector.extract_strided_slice %9 {offsets = [0, 8], sizes = [8, 8], strides = [1, 1]} : vector<8x32xf32> to vector<8x8xf32>
    %cst_19 = arith.constant dense<0.000000e+00> : vector<8x8xf32>
    %37 = tpu.matmul %34, %35, %cst_19 {dimension_numbers = #tpu.dot_dimension_numbers<[1], [1], [0], [0], [0, 0, 1, 0], [], []>} : vector<8x8xf32>, vector<8x8xf32>, vector<8x8xf32> -> vector<8x8xf32>
    %cst_20 = arith.constant -1.000000e+10 : f32
    %38 = vector.broadcast %cst_20 : f32 to vector<8x8xf32>
    %39 = arith.select %15, %37, %38 : vector<8x8xi1>, vector<8x8xf32>
    %cst_21 = arith.constant 0.353553385 : f32
    %40 = vector.broadcast %cst_21 : f32 to vector<8x8xf32>
    %41 = arith.mulf %39, %40 : vector<8x8xf32>
    %cst_22 = arith.constant dense<0xFF800000> : vector<8xf32>
    %42 = vector.multi_reduction <maximumf>, %41, %cst_22 [1] : vector<8x8xf32> to vector<8xf32>
    %43 = vector.shape_cast %42 : vector<8xf32> to vector<8x1xf32>
    %44 = vector.broadcast %43 : vector<8x1xf32> to vector<8x8xf32>
    %45 = arith.subf %41, %44 : vector<8x8xf32>
    %46 = math.exp %45 : vector<8x8xf32>
    %cst_23 = arith.constant dense<0.000000e+00> : vector<8xf32>
    %47 = vector.multi_reduction <add>, %46, %cst_23 [1] : vector<8x8xf32> to vector<8xf32>
    %48 = vector.shape_cast %47 : vector<8xf32> to vector<8x1xf32>
    %49 = vector.broadcast %48 : vector<8x1xf32> to vector<8x8xf32>
    %50 = arith.divf %46, %49 : vector<8x8xf32>
    %cst_24 = arith.constant dense<0.000000e+00> : vector<8x8xf32>
    %51 = tpu.matmul %50, %36, %cst_24 {dimension_numbers = #tpu.dot_dimension_numbers<[1], [0], [0], [1], [0, 0, 1, 1], [], []>} : vector<8x8xf32>, vector<8x8xf32>, vector<8x8xf32> -> vector<8x8xf32>
    %52 = vector.extract_strided_slice %5 {offsets = [0, 16], sizes = [8, 8], strides = [1, 1]} : vector<8x32xf32> to vector<8x8xf32>
    %53 = vector.extract_strided_slice %7 {offsets = [0, 16], sizes = [8, 8], strides = [1, 1]} : vector<8x32xf32> to vector<8x8xf32>
    %54 = vector.extract_strided_slice %9 {offsets = [0, 16], sizes = [8, 8], strides = [1, 1]} : vector<8x32xf32> to vector<8x8xf32>
    %cst_25 = arith.constant dense<0.000000e+00> : vector<8x8xf32>
    %55 = tpu.matmul %52, %53, %cst_25 {dimension_numbers = #tpu.dot_dimension_numbers<[1], [1], [0], [0], [0, 0, 1, 0], [], []>} : vector<8x8xf32>, vector<8x8xf32>, vector<8x8xf32> -> vector<8x8xf32>
    %cst_26 = arith.constant -1.000000e+10 : f32
    %56 = vector.broadcast %cst_26 : f32 to vector<8x8xf32>
    %57 = arith.select %15, %55, %56 : vector<8x8xi1>, vector<8x8xf32>
    %cst_27 = arith.constant 0.353553385 : f32
    %58 = vector.broadcast %cst_27 : f32 to vector<8x8xf32>
    %59 = arith.mulf %57, %58 : vector<8x8xf32>
    %cst_28 = arith.constant dense<0xFF800000> : vector<8xf32>
    %60 = vector.multi_reduction <maximumf>, %59, %cst_28 [1] : vector<8x8xf32> to vector<8xf32>
    %61 = vector.shape_cast %60 : vector<8xf32> to vector<8x1xf32>
    %62 = vector.broadcast %61 : vector<8x1xf32> to vector<8x8xf32>
    %63 = arith.subf %59, %62 : vector<8x8xf32>
    %64 = math.exp %63 : vector<8x8xf32>
    %cst_29 = arith.constant dense<0.000000e+00> : vector<8xf32>
    %65 = vector.multi_reduction <add>, %64, %cst_29 [1] : vector<8x8xf32> to vector<8xf32>
    %66 = vector.shape_cast %65 : vector<8xf32> to vector<8x1xf32>
    %67 = vector.broadcast %66 : vector<8x1xf32> to vector<8x8xf32>
    %68 = arith.divf %64, %67 : vector<8x8xf32>
    %cst_30 = arith.constant dense<0.000000e+00> : vector<8x8xf32>
    %69 = tpu.matmul %68, %54, %cst_30 {dimension_numbers = #tpu.dot_dimension_numbers<[1], [0], [0], [1], [0, 0, 1, 1], [], []>} : vector<8x8xf32>, vector<8x8xf32>, vector<8x8xf32> -> vector<8x8xf32>
    %70 = vector.extract_strided_slice %5 {offsets = [0, 24], sizes = [8, 8], strides = [1, 1]} : vector<8x32xf32> to vector<8x8xf32>
    %71 = vector.extract_strided_slice %7 {offsets = [0, 24], sizes = [8, 8], strides = [1, 1]} : vector<8x32xf32> to vector<8x8xf32>
    %72 = vector.extract_strided_slice %9 {offsets = [0, 24], sizes = [8, 8], strides = [1, 1]} : vector<8x32xf32> to vector<8x8xf32>
    %cst_31 = arith.constant dense<0.000000e+00> : vector<8x8xf32>
    %73 = tpu.matmul %70, %71, %cst_31 {dimension_numbers = #tpu.dot_dimension_numbers<[1], [1], [0], [0], [0, 0, 1, 0], [], []>} : vector<8x8xf32>, vector<8x8xf32>, vector<8x8xf32> -> vector<8x8xf32>
    %cst_32 = arith.constant -1.000000e+10 : f32
    %74 = vector.broadcast %cst_32 : f32 to vector<8x8xf32>
    %75 = arith.select %15, %73, %74 : vector<8x8xi1>, vector<8x8xf32>
    %cst_33 = arith.constant 0.353553385 : f32
    %76 = vector.broadcast %cst_33 : f32 to vector<8x8xf32>
    %77 = arith.mulf %75, %76 : vector<8x8xf32>
    %cst_34 = arith.constant dense<0xFF800000> : vector<8xf32>
    %78 = vector.multi_reduction <maximumf>, %77, %cst_34 [1] : vector<8x8xf32> to vector<8xf32>
    %79 = vector.shape_cast %78 : vector<8xf32> to vector<8x1xf32>
    %80 = vector.broadcast %79 : vector<8x1xf32> to vector<8x8xf32>
    %81 = arith.subf %77, %80 : vector<8x8xf32>
    %82 = math.exp %81 : vector<8x8xf32>
    %cst_35 = arith.constant dense<0.000000e+00> : vector<8xf32>
    %83 = vector.multi_reduction <add>, %82, %cst_35 [1] : vector<8x8xf32> to vector<8xf32>
    %84 = vector.shape_cast %83 : vector<8xf32> to vector<8x1xf32>
    %85 = vector.broadcast %84 : vector<8x1xf32> to vector<8x8xf32>
    %86 = arith.divf %82, %85 : vector<8x8xf32>
    %cst_36 = arith.constant dense<0.000000e+00> : vector<8x8xf32>
    %87 = tpu.matmul %86, %72, %cst_36 {dimension_numbers = #tpu.dot_dimension_numbers<[1], [0], [0], [1], [0, 0, 1, 1], [], []>} : vector<8x8xf32>, vector<8x8xf32>, vector<8x8xf32> -> vector<8x8xf32>
    %88 = tpu.concatenate %33, %51, %69, %87 in 1 : vector<8x8xf32>, vector<8x8xf32>, vector<8x8xf32>, vector<8x8xf32> -> vector<8x32xf32>
    %c0_37 = arith.constant 0 : index
    %c0_38 = arith.constant 0 : index
    %89 = vector.load %arg7[%c0_37, %c0_38] : memref<32x32xf32, #tpu.memory_space<vmem>>, vector<32x32xf32>
    %cst_39 = arith.constant dense<0.000000e+00> : vector<8x32xf32>
    %90 = tpu.matmul %88, %89, %cst_39 {dimension_numbers = #tpu.dot_dimension_numbers<[1], [0], [0], [1], [0, 0, 1, 1], [], []>} : vector<8x32xf32>, vector<32x32xf32>, vector<8x32xf32> -> vector<8x32xf32>
    %91 = arith.addf %1, %90 : vector<8x32xf32>
    %cst_40 = arith.constant 0.000000e+00 : f32
    %92 = vector.broadcast %cst_40 : f32 to vector<8x32xf32>
    %c0_41 = arith.constant 0 : index
    %c0_42 = arith.constant 0 : index
    %93 = vector.load %arg8[%c0_41, %c0_42] : memref<32x128xf32, #tpu.memory_space<vmem>>, vector<32x128xf32>
    %c0_43 = arith.constant 0 : index
    %c0_44 = arith.constant 0 : index
    %94 = vector.load %arg9[%c0_43, %c0_44] : memref<1x128xf32, #tpu.memory_space<vmem>>, vector<1x128xf32>
    %cst_45 = arith.constant dense<0.000000e+00> : vector<8x128xf32>
    %95 = tpu.matmul %91, %93, %cst_45 {dimension_numbers = #tpu.dot_dimension_numbers<[1], [0], [0], [1], [0, 0, 1, 1], [], []>} : vector<8x32xf32>, vector<32x128xf32>, vector<8x128xf32> -> vector<8x128xf32>
    %96 = vector.broadcast %94 : vector<1x128xf32> to vector<8x128xf32>
    %97 = arith.addf %95, %96 : vector<8x128xf32>
    %cst_46 = arith.constant 0.000000e+00 : f32
    %98 = vector.broadcast %cst_46 : f32 to vector<8x128xf32>
    %99 = arith.maximumf %97, %98 : vector<8x128xf32>
    %c0_47 = arith.constant 0 : index
    %c0_48 = arith.constant 0 : index
    %100 = vector.load %arg10[%c0_47, %c0_48] : memref<128x32xf32, #tpu.memory_space<vmem>>, vector<128x32xf32>
    %cst_49 = arith.constant dense<0.000000e+00> : vector<8x32xf32>
    %101 = tpu.matmul %99, %100, %cst_49 {dimension_numbers = #tpu.dot_dimension_numbers<[1], [0], [0], [1], [0, 0, 1, 1], [], []>} : vector<8x128xf32>, vector<128x32xf32>, vector<8x32xf32> -> vector<8x32xf32>
    %102 = arith.addf %92, %101 : vector<8x32xf32>
    %c0_50 = arith.constant 0 : index
    %c0_51 = arith.constant 0 : index
    %103 = vector.load %arg11[%c0_50, %c0_51] : memref<1x32xf32, #tpu.memory_space<vmem>>, vector<1x32xf32>
    %104 = vector.broadcast %103 : vector<1x32xf32> to vector<8x32xf32>
    %105 = arith.addf %102, %104 : vector<8x32xf32>
    %106 = arith.addf %91, %105 : vector<8x32xf32>
    %c0_52 = arith.constant 0 : index
    %c0_53 = arith.constant 0 : index
    %c0_54 = arith.constant 0 : index
    %107 = vector.load %arg12[%c0_52, %c0_53, %c0_54] : memref<1x8x32xf32, #tpu.memory_space<vmem>>, vector<1x8x32xf32>
    %108 = vector.shape_cast %107 : vector<1x8x32xf32> to vector<8x32xf32>
    %109 = vector.shape_cast %106 : vector<8x32xf32> to vector<1x8x32xf32>
    tpu.vector_store %arg12[%c0_52, %c0_53, %c0_54], %109 {strides = array<i32>} : memref<1x8x32xf32, #tpu.memory_space<vmem>>, vector<1x8x32xf32>,
    return
  }
  func.func @transform_0(%arg0: i32, %arg1: i32) -> (i32, i32, i32) {
    %c0_i32 = arith.constant 0 : i32
    %c0_i32_0 = arith.constant 0 : i32
    return %arg0, %arg1, %c0_i32 : i32, i32, i32
  }
  func.func @transform_1(%arg0: i32, %arg1: i32) -> (i32, i32, i32) {
    %c0_i32 = arith.constant 0 : i32
    %c0_i32_0 = arith.constant 0 : i32
    %c0_i32_1 = arith.constant 0 : i32
    return %arg0, %c0_i32, %c0_i32_0 : i32, i32, i32
  }
  func.func @transform_2(%arg0: i32, %arg1: i32) -> (i32, i32) {
    %c0_i32 = arith.constant 0 : i32
    %c0_i32_0 = arith.constant 0 : i32
    %c0_i32_1 = arith.constant 0 : i32
    return %c0_i32, %c0_i32_0 : i32, i32
  }
  func.func @transform_3(%arg0: i32, %arg1: i32) -> (i32, i32) {
    %c0_i32 = arith.constant 0 : i32
    %c0_i32_0 = arith.constant 0 : i32
    %c0_i32_1 = arith.constant 0 : i32
    return %c0_i32, %c0_i32_0 : i32, i32
  }
  func.func @transform_4(%arg0: i32, %arg1: i32) -> (i32, i32) {
    %c0_i32 = arith.constant 0 : i32
    %c0_i32_0 = arith.constant 0 : i32
    %c0_i32_1 = arith.constant 0 : i32
    return %c0_i32, %c0_i32_0 : i32, i32
  }
  func.func @transform_5(%arg0: i32, %arg1: i32) -> (i32, i32) {
    %c0_i32 = arith.constant 0 : i32
    %c0_i32_0 = arith.constant 0 : i32
    %c0_i32_1 = arith.constant 0 : i32
    return %c0_i32, %c0_i32_0 : i32, i32
  }
  func.func @transform_6(%arg0: i32, %arg1: i32) -> (i32, i32) {
    %c0_i32 = arith.constant 0 : i32
    %c0_i32_0 = arith.constant 0 : i32
    %c0_i32_1 = arith.constant 0 : i32
    return %c0_i32, %c0_i32_0 : i32, i32
  }
  func.func @transform_7(%arg0: i32, %arg1: i32) -> (i32, i32) {
    %c0_i32 = arith.constant 0 : i32
    %c0_i32_0 = arith.constant 0 : i32
    %c0_i32_1 = arith.constant 0 : i32
    return %c0_i32, %c0_i32_0 : i32, i32
  }
  func.func @transform_8(%arg0: i32, %arg1: i32) -> (i32, i32) {
    %c0_i32 = arith.constant 0 : i32
    %c0_i32_0 = arith.constant 0 : i32
    %c0_i32_1 = arith.constant 0 : i32
    return %c0_i32, %c0_i32_0 : i32, i32
  }
  func.func @transform_9(%arg0: i32, %arg1: i32) -> (i32, i32) {
    %c0_i32 = arith.constant 0 : i32
    %c0_i32_0 = arith.constant 0 : i32
    %c0_i32_1 = arith.constant 0 : i32
    return %c0_i32, %c0_i32_0 : i32, i32
  }
  func.func @transform_10(%arg0: i32, %arg1: i32) -> (i32, i32, i32) {
    %c0_i32 = arith.constant 0 : i32
    %c0_i32_0 = arith.constant 0 : i32
    return %arg0, %arg1, %c0_i32 : i32, i32, i32
  }
}

</mosaic_0001>

<llo_original>
// kernel: tpu_custom_call.1
$region0: #{tpu_custom_call.1}
  #allocation0 [shape = 'u32[]', space=smem, size = 0x4, offset = 0x4, fixed_abs, tag = 'smem constant byte address 0x4 - core index']
  #allocation1 [shape = 'u32[144,128]{1,0:T(1,128)}', space=vmem, size = 0x12000, scoped, tag = 'internal scratch']
  %s0 = inlined_call_operand.hbm [shape: f32[2,8,32], index: 0, kind: input, shape index: {}]
  %s1 = inlined_call_operand.hbm [shape: f32[2,8,32], index: 1, kind: input, shape index: {}]
  %s2 = inlined_call_operand.vmem [shape: f32[32,32], index: 2, kind: input, shape index: {}]
  %s3 = inlined_call_operand.vmem [shape: f32[32,32], index: 3, kind: input, shape index: {}]
  %s4 = inlined_call_operand.vmem [shape: f32[32,32], index: 4, kind: input, shape index: {}]
  %s5 = inlined_call_operand.vmem [shape: f32[32,32], index: 5, kind: input, shape index: {}]
  %s6 = inlined_call_operand.vmem [shape: f32[32,128], index: 6, kind: input, shape index: {}]
  %s7 = inlined_call_operand.vmem [shape: f32[1,128], index: 7, kind: input, shape index: {}]
  %s8 = inlined_call_operand.vmem [shape: f32[128,32], index: 8, kind: input, shape index: {}]
  %s9 = inlined_call_operand.vmem [shape: f32[1,32], index: 9, kind: input, shape index: {}]
  %s10 = inlined_call_operand.hbm [shape: f32[2,8,32], index: 10, kind: output, shape index: {}]
  %s11 = sld [smem:[#allocation0]]
  $region81: #{tpu_custom_call.1} parent=0
    _
  %s13 = ssub.s32 1, %s11
  %s14 = scalar_select 0, %s13, %s11
  $region1: #{tpu_custom_call.1} parent=0
    #allocation2 [shape = 'u8[8192]{0}', space=vmem, size = 0x2000, scoped, tag = 'input window, operand 0']
    #allocation3 [shape = 's32[2]{0}', space=sflag, size = 0x8, scoped, tag = 'scoped memory for tpu_custom_call.1']
    #allocation4 [shape = 's32[2]{0}', space=sflag, size = 0x8, scoped, tag = 'scoped memory for tpu_custom_call.1']
    #allocation5 [shape = 'u8[8192]{0}', space=vmem, size = 0x2000, scoped, tag = 'input window, operand 1']
    #allocation6 [shape = 's32[2]{0}', space=sflag, size = 0x8, scoped, tag = 'scoped memory for tpu_custom_call.1']
    #allocation7 [shape = 'u8[8192]{0}', space=vmem, size = 0x2000, scoped, tag = 'output window, operand 0']
    %15 = vsyncpa [#allocation3], 0
    %s16 = scalar_lea.sflag [#allocation3], 1
    %17 = vsyncpa %s16, 0
    %18 = vsyncpa [#allocation6], 0
    %s19 = scalar_lea.sflag [#allocation6], 1
    %20 = vsyncpa %s19, 0
    %21 = vsyncpa [#allocation4], 0
    %s22 = scalar_lea.sflag [#allocation4], 1
    %23 = vsyncpa %s22, 0
    loop: start=0, step=1, limit=4
    $region2: #{tpu_custom_call.1} parent=1 // loop_pre_header
      _
    $region3: #{tpu_custom_call.1} parent=1 // loop_header
      %s25 = sphi 0, %s29
      %p26 = scmp.ge.s32.totalorder %s25, 4
      %s32 = sphi 0, %s44
      %s33 = sphi 0, %s40
      %s34 = sphi 0, %s32
      %s35 = sphi 0, %s33
      %s36 = sphi 0, %s34
      %s37 = sphi 0, %s35
      %s49 = sphi 0, %s51
      %s52 = sphi 0, %s49
      %s53 = sphi 0, %s52
      %s69 = sphi 0, %s53
      %s75 = sphi 0, %s77
      %s78 = sphi 0, %s75
      %s79 = sphi 0, %s78
      %s95 = sphi 0, %s79
      %s99 = sphi 0, %s99
      %s101 = sphi 0, %s99
      %s102 = sphi 0, %s101
      %s116 = sphi 0, %s102
      %s120 = sphi 0, %s120
      %s122 = sphi 0, %s120
      %s123 = sphi 0, %s122
      %s137 = sphi 0, %s123
      %s141 = sphi 0, %s141
      %s143 = sphi 0, %s141
      %s144 = sphi 0, %s143
      %s158 = sphi 0, %s144
      %s162 = sphi 0, %s162
      %s164 = sphi 0, %s162
      %s165 = sphi 0, %s164
      %s179 = sphi 0, %s165
      %s183 = sphi 0, %s183
      %s185 = sphi 0, %s183
      %s186 = sphi 0, %s185
      %s200 = sphi 0, %s186
      %s204 = sphi 0, %s204
      %s206 = sphi 0, %s204
      %s207 = sphi 0, %s206
      %s221 = sphi 0, %s207
      %s225 = sphi 0, %s225
      %s227 = sphi 0, %s225
      %s228 = sphi 0, %s227
      %s242 = sphi 0, %s228
      %s246 = sphi 0, %s246
      %s248 = sphi 0, %s246
      %s249 = sphi 0, %s248
      %s263 = sphi 0, %s249
      %s271 = sphi 0, %s273
      %s274 = sphi 0, %s271
      %s275 = sphi 0, %s274
      %s291 = sphi 0, %s275
    $region4: #{tpu_custom_call.1} parent=1 // loop_header_branch
      %28 = sbr.rel (%p26) target = $region8
    $region5: #{tpu_custom_call.1} parent=1 // loop_body
      %s30 = ssub.s32 %s25, 1
      %s31 = ssub.s32 %s25, 2
      %s38 = sadd.s32 1, %s33
      %p39 = scmp.ge.s32.totalorder %s38, 1
      %s40 = scalar_select %p39, 0, %s38
      %s41 = sadd.s32 1, %s32
      %s42 = scalar_select %p39, %s41, %s32
      %p43 = scmp.ge.s32.totalorder %s42, 2
      %s44 = scalar_select %p43, 0, %s42
      %s45 = ssub.s32 %s32, %s44
      %s46 = ssub.s32 %s33, %s40
      %s47 = sor.u32 %s45, %s46
      %p48 = scmp.eq.s32.totalorder %s47, 0
      %s50 = sadd.s32 %s49, 1
      %s51 = scalar_select %p48, %s49, %s50
      %p54 = pneg %p48
      %p55 = scmp.eq.s32.totalorder %s25, 1
      %p56 = por %p54, %p55
      %p57 = scmp.ne.s32.totalorder %s49, %s52
      %p58 = scmp.eq.s32.totalorder %s25, 0
      %p59 = por %p57, %p58
      %p60 = scmp.ne.s32.totalorder %s49, %s52
      %p61 = scmp.eq.s32.totalorder %s30, 1
      %p62 = por %p60, %p61
      %p63 = scmp.ne.s32.totalorder %s52, %s53
      %p64 = scmp.eq.s32.totalorder %s30, 0
      %p65 = por %p63, %p64
      %p66 = scmp.ne.s32.totalorder %s52, %s53
      %p67 = scmp.eq.s32.totalorder %s31, 1
      %p68 = por %p66, %p67
      %p70 = scmp.ne.s32.totalorder %s53, %s69
      %p71 = scmp.eq.s32.totalorder %s31, 0
      %p72 = por %p70, %p71
      %s73 = ssub.s32 %s32, %s44
      %p74 = scmp.eq.s32.totalorder %s73, 0
      %s76 = sadd.s32 %s75, 1
      %s77 = scalar_select %p74, %s75, %s76
      %p80 = pneg %p74
      %p81 = scmp.eq.s32.totalorder %s25, 1
      %p82 = por %p80, %p81
      %p83 = scmp.ne.s32.totalorder %s75, %s78
      %p84 = scmp.eq.s32.totalorder %s25, 0
      %p85 = por %p83, %p84
      %p86 = scmp.ne.s32.totalorder %s75, %s78
      %p87 = scmp.eq.s32.totalorder %s30, 1
      %p88 = por %p86, %p87
      %p89 = scmp.ne.s32.totalorder %s78, %s79
      %p90 = scmp.eq.s32.totalorder %s30, 0
      %p91 = por %p89, %p90
      %p92 = scmp.ne.s32.totalorder %s78, %s79
      %p93 = scmp.eq.s32.totalorder %s31, 1
      %p94 = por %p92, %p93
      %p96 = scmp.ne.s32.totalorder %s79, %s95
      %p97 = scmp.eq.s32.totalorder %s31, 0
      %p98 = por %p96, %p97
      %s100 = sadd.s32 %s99, 1
      %p103 = scmp.eq.s32.totalorder %s25, 1
      %p104 = scmp.ne.s32.totalorder %s99, %s101
      %p105 = scmp.eq.s32.totalorder %s25, 0
      %p106 = por %p104, %p105
      %p107 = scmp.ne.s32.totalorder %s99, %s101
      %p108 = scmp.eq.s32.totalorder %s30, 1
      %p109 = por %p107, %p108
      %p110 = scmp.ne.s32.totalorder %s101, %s102
      %p111 = scmp.eq.s32.totalorder %s30, 0
      %p112 = por %p110, %p111
      %p113 = scmp.ne.s32.totalorder %s101, %s102
      %p114 = scmp.eq.s32.totalorder %s31, 1
      %p115 = por %p113, %p114
      %p117 = scmp.ne.s32.totalorder %s102, %s116
      %p118 = scmp.eq.s32.totalorder %s31, 0
      %p119 = por %p117, %p118
      %s121 = sadd.s32 %s120, 1
      %p124 = scmp.eq.s32.totalorder %s25, 1
      %p125 = scmp.ne.s32.totalorder %s120, %s122
      %p126 = scmp.eq.s32.totalorder %s25, 0
      %p127 = por %p125, %p126
      %p128 = scmp.ne.s32.totalorder %s120, %s122
      %p129 = scmp.eq.s32.totalorder %s30, 1
      %p130 = por %p128, %p129
      %p131 = scmp.ne.s32.totalorder %s122, %s123
      %p132 = scmp.eq.s32.totalorder %s30, 0
      %p133 = por %p131, %p132
      %p134 = scmp.ne.s32.totalorder %s122, %s123
      %p135 = scmp.eq.s32.totalorder %s31, 1
      %p136 = por %p134, %p135
      %p138 = scmp.ne.s32.totalorder %s123, %s137
      %p139 = scmp.eq.s32.totalorder %s31, 0
      %p140 = por %p138, %p139
      %s142 = sadd.s32 %s141, 1
      %p145 = scmp.eq.s32.totalorder %s25, 1
      %p146 = scmp.ne.s32.totalorder %s141, %s143
      %p147 = scmp.eq.s32.totalorder %s25, 0
      %p148 = por %p146, %p147
      %p149 = scmp.ne.s32.totalorder %s141, %s143
      %p150 = scmp.eq.s32.totalorder %s30, 1
      %p151 = por %p149, %p150
      %p152 = scmp.ne.s32.totalorder %s143, %s144
      %p153 = scmp.eq.s32.totalorder %s30, 0
      %p154 = por %p152, %p153
      %p155 = scmp.ne.s32.totalorder %s143, %s144
      %p156 = scmp.eq.s32.totalorder %s31, 1
      %p157 = por %p155, %p156
      %p159 = scmp.ne.s32.totalorder %s144, %s158
      %p160 = scmp.eq.s32.totalorder %s31, 0
      %p161 = por %p159, %p160
      %s163 = sadd.s32 %s162, 1
      %p166 = scmp.eq.s32.totalorder %s25, 1
      %p167 = scmp.ne.s32.totalorder %s162, %s164
      %p168 = scmp.eq.s32.totalorder %s25, 0
      %p169 = por %p167, %p168
      %p170 = scmp.ne.s32.totalorder %s162, %s164
      %p171 = scmp.eq.s32.totalorder %s30, 1
      %p172 = por %p170, %p171
      %p173 = scmp.ne.s32.totalorder %s164, %s165
      %p174 = scmp.eq.s32.totalorder %s30, 0
      %p175 = por %p173, %p174
      %p176 = scmp.ne.s32.totalorder %s164, %s165
      %p177 = scmp.eq.s32.totalorder %s31, 1
      %p178 = por %p176, %p177
      %p180 = scmp.ne.s32.totalorder %s165, %s179
      %p181 = scmp.eq.s32.totalorder %s31, 0
      %p182 = por %p180, %p181
      %s184 = sadd.s32 %s183, 1
      %p187 = scmp.eq.s32.totalorder %s25, 1
      %p188 = scmp.ne.s32.totalorder %s183, %s185
      %p189 = scmp.eq.s32.totalorder %s25, 0
      %p190 = por %p188, %p189
      %p191 = scmp.ne.s32.totalorder %s183, %s185
      %p192 = scmp.eq.s32.totalorder %s30, 1
      %p193 = por %p191, %p192
      %p194 = scmp.ne.s32.totalorder %s185, %s186
      %p195 = scmp.eq.s32.totalorder %s30, 0
      %p196 = por %p194, %p195
      %p197 = scmp.ne.s32.totalorder %s185, %s186
      %p198 = scmp.eq.s32.totalorder %s31, 1
      %p199 = por %p197, %p198
      %p201 = scmp.ne.s32.totalorder %s186, %s200
      %p202 = scmp.eq.s32.totalorder %s31, 0
      %p203 = por %p201, %p202
      %s205 = sadd.s32 %s204, 1
      %p208 = scmp.eq.s32.totalorder %s25, 1
      %p209 = scmp.ne.s32.totalorder %s204, %s206
      %p210 = scmp.eq.s32.totalorder %s25, 0
      %p211 = por %p209, %p210
      %p212 = scmp.ne.s32.totalorder %s204, %s206
      %p213 = scmp.eq.s32.totalorder %s30, 1
      %p214 = por %p212, %p213
      %p215 = scmp.ne.s32.totalorder %s206, %s207
      %p216 = scmp.eq.s32.totalorder %s30, 0
      %p217 = por %p215, %p216
      %p218 = scmp.ne.s32.totalorder %s206, %s207
      %p219 = scmp.eq.s32.totalorder %s31, 1
      %p220 = por %p218, %p219
      %p222 = scmp.ne.s32.totalorder %s207, %s221
      %p223 = scmp.eq.s32.totalorder %s31, 0
      %p224 = por %p222, %p223
      %s226 = sadd.s32 %s225, 1
      %p229 = scmp.eq.s32.totalorder %s25, 1
      %p230 = scmp.ne.s32.totalorder %s225, %s227
      %p231 = scmp.eq.s32.totalorder %s25, 0
      %p232 = por %p230, %p231
      %p233 = scmp.ne.s32.totalorder %s225, %s227
      %p234 = scmp.eq.s32.totalorder %s30, 1
      %p235 = por %p233, %p234
      %p236 = scmp.ne.s32.totalorder %s227, %s228
      %p237 = scmp.eq.s32.totalorder %s30, 0
      %p238 = por %p236, %p237
      %p239 = scmp.ne.s32.totalorder %s227, %s228
      %p240 = scmp.eq.s32.totalorder %s31, 1
      %p241 = por %p239, %p240
      %p243 = scmp.ne.s32.totalorder %s228, %s242
      %p244 = scmp.eq.s32.totalorder %s31, 0
      %p245 = por %p243, %p244
      %s247 = sadd.s32 %s246, 1
      %p250 = scmp.eq.s32.totalorder %s25, 1
      %p251 = scmp.ne.s32.totalorder %s246, %s248
      %p252 = scmp.eq.s32.totalorder %s25, 0
      %p253 = por %p251, %p252
      %p254 = scmp.ne.s32.totalorder %s246, %s248
      %p255 = scmp.eq.s32.totalorder %s30, 1
      %p256 = por %p254, %p255
      %p257 = scmp.ne.s32.totalorder %s248, %s249
      %p258 = scmp.eq.s32.totalorder %s30, 0
      %p259 = por %p257, %p258
      %p260 = scmp.ne.s32.totalorder %s248, %s249
      %p261 = scmp.eq.s32.totalorder %s31, 1
      %p262 = por %p260, %p261
      %p264 = scmp.ne.s32.totalorder %s249, %s263
      %p265 = scmp.eq.s32.totalorder %s31, 0
      %p266 = por %p264, %p265
      %s267 = ssub.s32 %s32, %s44
      %s268 = ssub.s32 %s33, %s40
      %s269 = sor.u32 %s267, %s268
      %p270 = scmp.eq.s32.totalorder %s269, 0
      %s272 = sadd.s32 %s271, 1
      %s273 = scalar_select %p270, %s271, %s272
      %p276 = pneg %p270
      %p277 = scmp.eq.s32.totalorder %s25, 1
      %p278 = por %p276, %p277
      %p279 = scmp.ne.s32.totalorder %s271, %s274
      %p280 = scmp.eq.s32.totalorder %s25, 0
      %p281 = por %p279, %p280
      %p282 = scmp.ne.s32.totalorder %s271, %s274
      %p283 = scmp.eq.s32.totalorder %s30, 1
      %p284 = por %p282, %p283
      %p285 = scmp.ne.s32.totalorder %s274, %s275
      %p286 = scmp.eq.s32.totalorder %s30, 0
      %p287 = por %p285, %p286
      %p288 = scmp.ne.s32.totalorder %s274, %s275
      %p289 = scmp.eq.s32.totalorder %s31, 1
      %p290 = por %p288, %p289
      %p292 = scmp.ne.s32.totalorder %s275, %s291
      %p293 = scmp.eq.s32.totalorder %s31, 0
      %p294 = por %p292, %p293
      %p295 = scmp.le.s32.totalorder 1, %s25
      %p296 = scmp.lt.s32.totalorder %s25, 3
      %p297 = pnand %p295, %p296
      %p298 = pneg %p297
      // Predicated region
      $region9: #{tpu_custom_call.1} parent=5 // pred_check
        _
      $region10: #{tpu_custom_call.1} parent=5 // pred_check_branch
        %300 = sbr.rel (%p297) target = $region12
      $region11: #{tpu_custom_call.1} parent=5 // pred_region
        %s301 = ssub.s32 %s25, 1
        // Predicated region
        $region13: #{tpu_custom_call.1} parent=11 // pred_check
          %p302 = pneg %p112
        $region14: #{tpu_custom_call.1} parent=11 // pred_check_branch
          %304 = sbr.rel (%p302) target = $region16
        $region15: #{tpu_custom_call.1} parent=11 // pred_region
          _
        $region16: #{tpu_custom_call.1} parent=11 // pred_fallthru
          _
        // Predicated region
        $region17: #{tpu_custom_call.1} parent=11 // pred_check
          %p305 = pneg %p133
        $region18: #{tpu_custom_call.1} parent=11 // pred_check_branch
          %307 = sbr.rel (%p305) target = $region20
        $region19: #{tpu_custom_call.1} parent=11 // pred_region
          _
        $region20: #{tpu_custom_call.1} parent=11 // pred_fallthru
          _
        // Predicated region
        $region21: #{tpu_custom_call.1} parent=11 // pred_check
          %p308 = pneg %p154
        $region22: #{tpu_custom_call.1} parent=11 // pred_check_branch
          %310 = sbr.rel (%p308) target = $region24
        $region23: #{tpu_custom_call.1} parent=11 // pred_region
          _
        $region24: #{tpu_custom_call.1} parent=11 // pred_fallthru
          _
        // Predicated region
        $region25: #{tpu_custom_call.1} parent=11 // pred_check
          %p311 = pneg %p175
        $region26: #{tpu_custom_call.1} parent=11 // pred_check_branch
          %313 = sbr.rel (%p311) target = $region28
        $region27: #{tpu_custom_call.1} parent=11 // pred_region
          _
        $region28: #{tpu_custom_call.1} parent=11 // pred_fallthru
          _
        // Predicated region
        $region29: #{tpu_custom_call.1} parent=11 // pred_check
          %p314 = pneg %p196
        $region30: #{tpu_custom_call.1} parent=11 // pred_check_branch
          %316 = sbr.rel (%p314) target = $region32
        $region31: #{tpu_custom_call.1} parent=11 // pred_region
          _
        $region32: #{tpu_custom_call.1} parent=11 // pred_fallthru
          _
        // Predicated region
        $region33: #{tpu_custom_call.1} parent=11 // pred_check
          %p317 = pneg %p217
        $region34: #{tpu_custom_call.1} parent=11 // pred_check_branch
          %319 = sbr.rel (%p317) target = $region36
        $region35: #{tpu_custom_call.1} parent=11 // pred_region
          _
        $region36: #{tpu_custom_call.1} parent=11 // pred_fallthru
          _
        // Predicated region
        $region37: #{tpu_custom_call.1} parent=11 // pred_check
          %p320 = pneg %p238
        $region38: #{tpu_custom_call.1} parent=11 // pred_check_branch
          %322 = sbr.rel (%p320) target = $region40
        $region39: #{tpu_custom_call.1} parent=11 // pred_region
          _
        $region40: #{tpu_custom_call.1} parent=11 // pred_fallthru
          _
        // Predicated region
        $region41: #{tpu_custom_call.1} parent=11 // pred_check
          %p323 = pneg %p259
        $region42: #{tpu_custom_call.1} parent=11 // pred_check_branch
          %325 = sbr.rel (%p323) target = $region44
        $region43: #{tpu_custom_call.1} parent=11 // pred_region
          _
        $region44: #{tpu_custom_call.1} parent=11 // pred_fallthru
          _
      $region12: #{tpu_custom_call.1} parent=5 // pred_fallthru
        _
      %p326 = scmp.lt.s32.totalorder %s25, 2
      // Predicated region
      $region45: #{tpu_custom_call.1} parent=5 // pred_check
        %p327 = pneg %p326
      $region46: #{tpu_custom_call.1} parent=5 // pred_check_branch
        %329 = sbr.rel (%p327) target = $region48
      $region47: #{tpu_custom_call.1} parent=5 // pred_region
        // Predicated region
        $region49: #{tpu_custom_call.1} parent=47 // pred_check
          %p330 = pneg %p59
        $region50: #{tpu_custom_call.1} parent=47 // pred_check_branch
          %332 = sbr.rel (%p330) target = $region52
        $region51: #{tpu_custom_call.1} parent=47 // pred_region
          %s333 = sand.u32 %s49, 1
          %s334 = scalar_lea.sflag [#allocation3], %s333
          %s335 = sand.u32 %s49, 1
          %s336 = smul.addr %s335, 8
          %s337 = scalar_lea.vmem [#allocation2], %s336
          %s339 = ssub.s32 128, 128
          %340 = vsyncadd %s334, %s339
          %s341 = sadd.s32 %s33, %s32
          %s342 = smul.addr %s341, 128
          %s343 = scalar_lea.hbm %s0, %s342
          %s345 = sshll.u32 %s337, 4
          %s346 = int_to_ptr.vmem [resolvable:$true] %s345
          %348 = dma.hbm_to_vmem [thread:$0]  %s343, 128, %s346, %s334
        $region52: #{tpu_custom_call.1} parent=47 // pred_fallthru
          _
        // Predicated region
        $region53: #{tpu_custom_call.1} parent=47 // pred_check
          %p349 = pneg %p85
        $region54: #{tpu_custom_call.1} parent=47 // pred_check_branch
          %351 = sbr.rel (%p349) target = $region56
        $region55: #{tpu_custom_call.1} parent=47 // pred_region
          %s352 = sand.u32 %s75, 1
          %s353 = scalar_lea.sflag [#allocation6], %s352
          %s354 = sand.u32 %s75, 1
          %s355 = smul.addr %s354, 8
          %s356 = scalar_lea.vmem [#allocation5], %s355
          %s358 = ssub.s32 128, 128
          %359 = vsyncadd %s353, %s358
          %s360 = smul.addr %s32, 128
          %s361 = scalar_lea.hbm %s1, %s360
          %s363 = sshll.u32 %s356, 4
          %s364 = int_to_ptr.vmem [resolvable:$true] %s363
          %366 = dma.hbm_to_vmem [thread:$0]  %s361, 128, %s364, %s353
        $region56: #{tpu_custom_call.1} parent=47 // pred_fallthru
          _
      $region48: #{tpu_custom_call.1} parent=5 // pred_fallthru
        _
      %p367 = scmp.le.s32.totalorder 1, %s25
      %p368 = scmp.lt.s32.totalorder %s25, 3
      %p369 = pnand %p367, %p368
      %p370 = pneg %p369
      // Predicated region
      $region57: #{tpu_custom_call.1} parent=5 // pred_check
        _
      $region58: #{tpu_custom_call.1} parent=5 // pred_check_branch
        %372 = sbr.rel (%p369) target = $region60
      $region59: #{tpu_custom_call.1} parent=5 // pred_region
        %s373 = ssub.s32 %s25, 1
        %s374 = sand.u32 %s52, 1
        %s375 = scalar_lea.sflag [#allocation3], %s374
        %s376 = sand.u32 %s52, 1
        %s377 = smul.addr %s376, 8
        %s378 = scalar_lea.vmem [#allocation2], %s377
        // Predicated region
        $region61: #{tpu_custom_call.1} parent=59 // pred_check
          %p379 = pneg %p65
        $region62: #{tpu_custom_call.1} parent=59 // pred_check_branch
          %381 = sbr.rel (%p379) target = $region64
        $region63: #{tpu_custom_call.1} parent=59 // pred_region
          %382 = dma.done %s375, 128
        $region64: #{tpu_custom_call.1} parent=59 // pred_fallthru
          _
        %s383 = sand.u32 %s78, 1
        %s384 = scalar_lea.sflag [#allocation6], %s383
        %s385 = sand.u32 %s78, 1
        %s386 = smul.addr %s385, 8
        %s387 = scalar_lea.vmem [#allocation5], %s386
        // Predicated region
        $region65: #{tpu_custom_call.1} parent=59 // pred_check
          %p388 = pneg %p91
        $region66: #{tpu_custom_call.1} parent=59 // pred_check_branch
          %390 = sbr.rel (%p388) target = $region68
        $region67: #{tpu_custom_call.1} parent=59 // pred_region
          %391 = dma.done %s384, 128
        $region68: #{tpu_custom_call.1} parent=59 // pred_fallthru
          _
        %s392 = sand.u32 %s52, 1
        %s393 = scalar_lea.sflag [#allocation3], %s392
        %s394 = sand.u32 %s52, 1
        %s395 = smul.addr %s394, 8
        %s396 = scalar_lea.vmem [#allocation2], %s395
        %p397 = pneg %p65
        %p398 = pneg %p62
        %s399 = sand.u32 %s78, 1
        %s400 = scalar_lea.sflag [#allocation6], %s399
        %s401 = sand.u32 %s78, 1
        %s402 = smul.addr %s401, 8
        %s403 = scalar_lea.vmem [#allocation5], %s402
        %p404 = pneg %p91
        %p405 = pneg %p88
        %p406 = pneg %p112
        %p407 = pneg %p109
        %p408 = pneg %p133
        %p409 = pneg %p130
        %p410 = pneg %p154
        %p411 = pneg %p151
        %p412 = pneg %p175
        %p413 = pneg %p172
        %p414 = pneg %p196
        %p415 = pneg %p193
        %p416 = pneg %p217
        %p417 = pneg %p214
        %p418 = pneg %p238
        %p419 = pneg %p235
        %p420 = pneg %p259
        %p421 = pneg %p256
        %p422 = pneg %p287
        %p423 = pneg %p284
        %s424 = sand.u32 %s274, 1
        %s425 = scalar_lea.sflag [#allocation4], %s424
        %s426 = sand.u32 %s274, 1
        %s427 = smul.addr %s426, 8
        %s428 = scalar_lea.vmem [#allocation7], %s427
        %v429 = vld [vmem:[%s378] sm:$0xff]
        %v430 = vld [vmem:[%s387] sm:$0xff]
        %v431 = vld [vmem:[%s2] sm:$0xff]
        %v432 = vld [vmem:[%s2 + $0x8] sm:$0xff]
        %v433 = vld [vmem:[%s2 + $0x10] sm:$0xff]
        %v434 = vld [vmem:[%s2 + $0x18] sm:$0xff]
        %vm435 = vcmask 261120
        %v437 = vsel %vm435, %v429, 0
        %439 = vmatprep.subr.mxu0 0.0
        %440 = vmatpush1.msra.mxu0 %v431
        %441 = vmatprep.subr.mxu0 0.0
        %442 = vmatpush1.msra.mxu0 %v432
        %443 = vmatprep.subr.mxu0 0.0
        %444 = vmatpush1.msra.mxu0 %v433
        %445 = vmatprep.subr.mxu0 0.0
        %446 = vmatpush1.msra.mxu0 %v434
        %447 = vmatprep.subr.mxu0 0.0
        %448 = vmatpush1.msra.mxu0 0.0
        %449 = vmatprep.subr.mxu0 0.0
        %450 = vmatpush1.msra.mxu0 0.0
        %451 = vmatprep.subr.mxu0 0.0
        %452 = vmatpush1.msra.mxu0 0.0
        %453 = vmatprep.subr.mxu0 0.0
        %454 = vmatpush1.msra.mxu0 0.0
        %455 = vmatprep.subr.mxu0 0.0
        %456 = vmatpush1.msra.mxu0 0.0
        %457 = vmatprep.subr.mxu0 0.0
        %458 = vmatpush1.msra.mxu0 0.0
        %459 = vmatprep.subr.mxu0 0.0
        %460 = vmatpush1.msra.mxu0 0.0
        %461 = vmatprep.subr.mxu0 0.0
        %462 = vmatpush1.msra.mxu0 0.0
        %463 = vmatprep.subr.mxu0 0.0
        %464 = vmatpush1.msra.mxu0 0.0
        %465 = vmatprep.subr.mxu0 0.0
        %466 = vmatpush1.msra.mxu0 0.0
        %467 = vmatprep.subr.mxu0 0.0
        %468 = vmatpush1.msra.mxu0 0.0
        %469 = vmatprep.subr.mxu0 0.0
        %470 = vmatpush1.msra.mxu0 0.0
        %471 = vmatprep.subr.mxu0 0.0
        %472 = vmatpush1.msra.mxu0 0.0
        %473 = vmatprep.subr.mxu0 0.0
        %474 = vmatpush1.msra.mxu0 0.0
        %475 = vmatprep.subr.mxu0 0.0
        %476 = vmatpush1.msra.mxu0 0.0
        %477 = vmatprep.subr.mxu0 0.0
        %478 = vmatpush1.msra.mxu0 0.0
        %479 = vmatprep.subr.mxu0 0.0
        %480 = vmatpush1.msra.mxu0 0.0
        %481 = vmatprep.subr.mxu0 0.0
        %482 = vmatpush1.msra.mxu0 0.0
        %483 = vmatprep.subr.mxu0 0.0
        %484 = vmatpush1.msra.mxu0 0.0
        %485 = vmatprep.subr.mxu0 0.0
        %486 = vmatpush1.msra.mxu0 0.0
        %487 = vmatprep.subr.mxu0 0.0
        %488 = vmatpush1.msra.mxu0 0.0
        %489 = vmatprep.subr.mxu0 0.0
        %490 = vmatpush1.msra.mxu0 0.0
        %491 = vmatprep.subr.mxu0 0.0
        %492 = vmatpush1.msra.mxu0 0.0
        %493 = vmatprep.subr.mxu0 0.0
        %494 = vmatpush1.msra.mxu0 0.0
        %495 = vmatprep.subr.mxu0 0.0
        %496 = vmatpush1.msra.mxu0 0.0
        %497 = vmatprep.subr.mxu0 0.0
        %498 = vmatpush1.msra.mxu0 0.0
        %499 = vmatprep.subr.mxu0 0.0
        %500 = vmatpush1.msra.mxu0 0.0
        %501 = vmatprep.subr.mxu0 0.0
        %502 = vmatpush1.msra.mxu0 0.0
        %503 = vmatprep.mubr.f32.mxu0 0.0
        %504 = vmatmul.mubr.f32.gmra.mrb[0].mxu0 %v437
        %v505 = vpop.f32.mrb[0].mxu0
        %v506 = vadd.f32 0.0, %v505
        %v507 = vpop.f32.mrb[0].mxu0
        %508 = vdwg.mxu0
        %v509 = vld [vmem:[%s3] sm:$0xff]
        %v510 = vld [vmem:[%s3 + $0x8] sm:$0xff]
        %v511 = vld [vmem:[%s3 + $0x10] sm:$0xff]
        %v512 = vld [vmem:[%s3 + $0x18] sm:$0xff]
        %v514 = vsel %vm435, %v430, 0
        %516 = vmatprep.subr.mxu0 0.0
        %517 = vmatpush1.msra.mxu0 %v509
        %518 = vmatprep.subr.mxu0 0.0
        %519 = vmatpush1.msra.mxu0 %v510
        %520 = vmatprep.subr.mxu0 0.0
        %521 = vmatpush1.msra.mxu0 %v511
        %522 = vmatprep.subr.mxu0 0.0
        %523 = vmatpush1.msra.mxu0 %v512
        %524 = vmatprep.subr.mxu0 0.0
        %525 = vmatpush1.msra.mxu0 0.0
        %526 = vmatprep.subr.mxu0 0.0
        %527 = vmatpush1.msra.mxu0 0.0
        %528 = vmatprep.subr.mxu0 0.0
        %529 = vmatpush1.msra.mxu0 0.0
        %530 = vmatprep.subr.mxu0 0.0
        %531 = vmatpush1.msra.mxu0 0.0
        %532 = vmatprep.subr.mxu0 0.0
        %533 = vmatpush1.msra.mxu0 0.0
        %534 = vmatprep.subr.mxu0 0.0
        %535 = vmatpush1.msra.mxu0 0.0
        %536 = vmatprep.subr.mxu0 0.0
        %537 = vmatpush1.msra.mxu0 0.0
        %538 = vmatprep.subr.mxu0 0.0
        %539 = vmatpush1.msra.mxu0 0.0
        %540 = vmatprep.subr.mxu0 0.0
        %541 = vmatpush1.msra.mxu0 0.0
        %542 = vmatprep.subr.mxu0 0.0
        %543 = vmatpush1.msra.mxu0 0.0
        %544 = vmatprep.subr.mxu0 0.0
        %545 = vmatpush1.msra.mxu0 0.0
        %546 = vmatprep.subr.mxu0 0.0
        %547 = vmatpush1.msra.mxu0 0.0
        %548 = vmatprep.subr.mxu0 0.0
        %549 = vmatpush1.msra.mxu0 0.0
        %550 = vmatprep.subr.mxu0 0.0
        %551 = vmatpush1.msra.mxu0 0.0
        %552 = vmatprep.subr.mxu0 0.0
        %553 = vmatpush1.msra.mxu0 0.0
        %554 = vmatprep.subr.mxu0 0.0
        %555 = vmatpush1.msra.mxu0 0.0
        %556 = vmatprep.subr.mxu0 0.0
        %557 = vmatpush1.msra.mxu0 0.0
        %558 = vmatprep.subr.mxu0 0.0
        %559 = vmatpush1.msra.mxu0 0.0
        %560 = vmatprep.subr.mxu0 0.0
        %561 = vmatpush1.msra.mxu0 0.0
        %562 = vmatprep.subr.mxu0 0.0
        %563 = vmatpush1.msra.mxu0 0.0
        %564 = vmatprep.subr.mxu0 0.0
        %565 = vmatpush1.msra.mxu0 0.0
        %566 = vmatprep.subr.mxu0 0.0
        %567 = vmatpush1.msra.mxu0 0.0
        %568 = vmatprep.subr.mxu0 0.0
        %569 = vmatpush1.msra.mxu0 0.0
        %570 = vmatprep.subr.mxu0 0.0
        %571 = vmatpush1.msra.mxu0 0.0
        %572 = vmatprep.subr.mxu0 0.0
        %573 = vmatpush1.msra.mxu0 0.0
        %574 = vmatprep.subr.mxu0 0.0
        %575 = vmatpush1.msra.mxu0 0.0
        %576 = vmatprep.subr.mxu0 0.0
        %577 = vmatpush1.msra.mxu0 0.0
        %578 = vmatprep.subr.mxu0 0.0
        %579 = vmatpush1.msra.mxu0 0.0
        %580 = vmatprep.mubr.f32.mxu0 0.0
        %581 = vmatmul.mubr.f32.gmra.mrb[0].mxu0 %v514
        %v582 = vpop.f32.mrb[0].mxu0
        %v583 = vadd.f32 0.0, %v582
        %v584 = vpop.f32.mrb[0].mxu0
        %585 = vdwg.mxu0
        %v586 = vld [vmem:[%s4] sm:$0xff]
        %v587 = vld [vmem:[%s4 + $0x8] sm:$0xff]
        %v588 = vld [vmem:[%s4 + $0x10] sm:$0xff]
        %v589 = vld [vmem:[%s4 + $0x18] sm:$0xff]
        %590 = vmatprep.subr.mxu0 0.0
        %591 = vmatpush1.msra.mxu0 %v586
        %592 = vmatprep.subr.mxu0 0.0
        %593 = vmatpush1.msra.mxu0 %v587
        %594 = vmatprep.subr.mxu0 0.0
        %595 = vmatpush1.msra.mxu0 %v588
        %596 = vmatprep.subr.mxu0 0.0
        %597 = vmatpush1.msra.mxu0 %v589
        %598 = vmatprep.subr.mxu0 0.0
        %599 = vmatpush1.msra.mxu0 0.0
        %600 = vmatprep.subr.mxu0 0.0
        %601 = vmatpush1.msra.mxu0 0.0
        %602 = vmatprep.subr.mxu0 0.0
        %603 = vmatpush1.msra.mxu0 0.0
        %604 = vmatprep.subr.mxu0 0.0
        %605 = vmatpush1.msra.mxu0 0.0
        %606 = vmatprep.subr.mxu0 0.0
        %607 = vmatpush1.msra.mxu0 0.0
        %608 = vmatprep.subr.mxu0 0.0
        %609 = vmatpush1.msra.mxu0 0.0
        %610 = vmatprep.subr.mxu0 0.0
        %611 = vmatpush1.msra.mxu0 0.0
        %612 = vmatprep.subr.mxu0 0.0
        %613 = vmatpush1.msra.mxu0 0.0
        %614 = vmatprep.subr.mxu0 0.0
        %615 = vmatpush1.msra.mxu0 0.0
        %616 = vmatprep.subr.mxu0 0.0
        %617 = vmatpush1.msra.mxu0 0.0
        %618 = vmatprep.subr.mxu0 0.0
        %619 = vmatpush1.msra.mxu0 0.0
        %620 = vmatprep.subr.mxu0 0.0
        %621 = vmatpush1.msra.mxu0 0.0
        %622 = vmatprep.subr.mxu0 0.0
        %623 = vmatpush1.msra.mxu0 0.0
        %624 = vmatprep.subr.mxu0 0.0
        %625 = vmatpush1.msra.mxu0 0.0
        %626 = vmatprep.subr.mxu0 0.0
        %627 = vmatpush1.msra.mxu0 0.0
        %628 = vmatprep.subr.mxu0 0.0
        %629 = vmatpush1.msra.mxu0 0.0
        %630 = vmatprep.subr.mxu0 0.0
        %631 = vmatpush1.msra.mxu0 0.0
        %632 = vmatprep.subr.mxu0 0.0
        %633 = vmatpush1.msra.mxu0 0.0
        %634 = vmatprep.subr.mxu0 0.0
        %635 = vmatpush1.msra.mxu0 0.0
        %636 = vmatprep.subr.mxu0 0.0
        %637 = vmatpush1.msra.mxu0 0.0
        %638 = vmatprep.subr.mxu0 0.0
        %639 = vmatpush1.msra.mxu0 0.0
        %640 = vmatprep.subr.mxu0 0.0
        %641 = vmatpush1.msra.mxu0 0.0
        %642 = vmatprep.subr.mxu0 0.0
        %643 = vmatpush1.msra.mxu0 0.0
        %644 = vmatprep.subr.mxu0 0.0
        %645 = vmatpush1.msra.mxu0 0.0
        %646 = vmatprep.subr.mxu0 0.0
        %647 = vmatpush1.msra.mxu0 0.0
        %648 = vmatprep.subr.mxu0 0.0
        %649 = vmatpush1.msra.mxu0 0.0
        %650 = vmatprep.subr.mxu0 0.0
        %651 = vmatpush1.msra.mxu0 0.0
        %652 = vmatprep.subr.mxu0 0.0
        %653 = vmatpush1.msra.mxu0 0.0
        %654 = vmatprep.mubr.f32.mxu0 0.0
        %655 = vmatmul.mubr.f32.gmra.mrb[0].mxu0 %v514
        %v656 = vpop.f32.mrb[0].mxu0
        %v657 = vadd.f32 0.0, %v656
        %v658 = vpop.f32.mrb[0].mxu0
        %659 = vdwg.mxu0
        %s660 = smul.u32 %s35, 8
        %v661 = vlaneseq
        %v662 = vshrl.u32 %v661, 7
        %v663 = vstv %s660
        %v664 = vadd.s32 %v663, %v662
        %v665 = vlaneseq
        %v666 = vand.u32 %v665, 127
        %vm667 = vcmp.le.s32.totalorder %v666, %v664
        %vm668 = vcmask 64512
        %v670 = vsel %vm668, %v506, 0
        %v673 = vsel %vm668, %v583, 0
        %675 = vmatprep.subr.mxu0 0.0
        %676 = vmatpush1.xpose.msra.mxu0 %v673
        %677 = vmatprep.subr.mxu0 0.0
        %678 = vmatpush1.xpose.msra.mxu0 0.0
        %679 = vmatprep.subr.mxu0 0.0
        %680 = vmatpush1.xpose.msra.mxu0 0.0
        %681 = vmatprep.subr.mxu0 0.0
        %682 = vmatpush1.xpose.msra.mxu0 0.0
        %683 = vmatprep.subr.mxu0 0.0
        %684 = vmatpush1.xpose.msra.mxu0 0.0
        %685 = vmatprep.subr.mxu0 0.0
        %686 = vmatpush1.xpose.msra.mxu0 0.0
        %687 = vmatprep.subr.mxu0 0.0
        %688 = vmatpush1.xpose.msra.mxu0 0.0
        %689 = vmatprep.subr.mxu0 0.0
        %690 = vmatpush1.xpose.msra.mxu0 0.0
        %691 = vmatprep.subr.mxu0 0.0
        %692 = vmatpush1.xpose.msra.mxu0 0.0
        %693 = vmatprep.subr.mxu0 0.0
        %694 = vmatpush1.xpose.msra.mxu0 0.0
        %695 = vmatprep.subr.mxu0 0.0
        %696 = vmatpush1.xpose.msra.mxu0 0.0
        %697 = vmatprep.subr.mxu0 0.0
        %698 = vmatpush1.xpose.msra.mxu0 0.0
        %699 = vmatprep.subr.mxu0 0.0
        %700 = vmatpush1.xpose.msra.mxu0 0.0
        %701 = vmatprep.subr.mxu0 0.0
        %702 = vmatpush1.xpose.msra.mxu0 0.0
        %703 = vmatprep.subr.mxu0 0.0
        %704 = vmatpush1.xpose.msra.mxu0 0.0
        %705 = vmatprep.subr.mxu0 0.0
        %706 = vmatpush1.xpose.msra.mxu0 0.0
        %707 = vmatprep.subr.mxu0 0.0
        %708 = vmatpush1.xpose.msra.mxu0 0.0
        %709 = vmatprep.subr.mxu0 0.0
        %710 = vmatpush1.xpose.msra.mxu0 0.0
        %711 = vmatprep.subr.mxu0 0.0
        %712 = vmatpush1.xpose.msra.mxu0 0.0
        %713 = vmatprep.subr.mxu0 0.0
        %714 = vmatpush1.xpose.msra.mxu0 0.0
        %715 = vmatprep.subr.mxu0 0.0
        %716 = vmatpush1.xpose.msra.mxu0 0.0
        %717 = vmatprep.subr.mxu0 0.0
        %718 = vmatpush1.xpose.msra.mxu0 0.0
        %719 = vmatprep.subr.mxu0 0.0
        %720 = vmatpush1.xpose.msra.mxu0 0.0
        %721 = vmatprep.subr.mxu0 0.0
        %722 = vmatpush1.xpose.msra.mxu0 0.0
        %723 = vmatprep.subr.mxu0 0.0
        %724 = vmatpush1.xpose.msra.mxu0 0.0
        %725 = vmatprep.subr.mxu0 0.0
        %726 = vmatpush1.xpose.msra.mxu0 0.0
        %727 = vmatprep.subr.mxu0 0.0
        %728 = vmatpush1.xpose.msra.mxu0 0.0
        %729 = vmatprep.subr.mxu0 0.0
        %730 = vmatpush1.xpose.msra.mxu0 0.0
        %731 = vmatprep.subr.mxu0 0.0
        %732 = vmatpush1.xpose.msra.mxu0 0.0
        %733 = vmatprep.subr.mxu0 0.0
        %734 = vmatpush1.xpose.msra.mxu0 0.0
        %735 = vmatprep.subr.mxu0 0.0
        %736 = vmatpush1.xpose.msra.mxu0 0.0
        %737 = vmatprep.subr.mxu0 0.0
        %738 = vmatpush1.xpose.msra.mxu0 0.0
        %739 = vmatprep.mubr.f32.mxu0 0.0
        %740 = vmatmul.mubr.f32.gmra.mrb[0].mxu0 %v670
        %v741 = vpop.f32.mrb[0].mxu0
        %v742 = vadd.f32 0.0, %v741
        %v743 = vpop.f32.mrb[0].mxu0
        %744 = vdwg.mxu0
        %v745 = vsel %vm667, %v742, -1e+10
        %v746 = vmul.f32 %v745, 0.35355338
        %v747 = vsel %vm668, %v746, -inf
        %748 = vmax.xlane.f32.xlu0 %v747
        %v749 = vpop.xlane.xlu0 %748
        %v750 = vsub.f32 %v746, %v749
        %v751 = vmul.f32 %v750, 1.442695
        %v752 = vpow.pop %v751
        %v753 = vsel %vm668, %v752, 0.0
        %754 = vadd.xlane.f32.xlu0 %v753
        %v755 = vpop.xlane.xlu0 %754
        %v756 = vrcp.pop %v755
        %v757 = vmul.f32 %v752, %v756
        %v759 = vsel %vm668, %v757, 0
        %761 = vmatprep.subr.mxu0 0.0
        %762 = vmatpush1.msra.mxu0 %v657
        %763 = vmatprep.subr.mxu0 0.0
        %764 = vmatpush1.msra.mxu0 0.0
        %765 = vmatprep.subr.mxu0 0.0
        %766 = vmatpush1.msra.mxu0 0.0
        %767 = vmatprep.subr.mxu0 0.0
        %768 = vmatpush1.msra.mxu0 0.0
        %769 = vmatprep.subr.mxu0 0.0
        %770 = vmatpush1.msra.mxu0 0.0
        %771 = vmatprep.subr.mxu0 0.0
        %772 = vmatpush1.msra.mxu0 0.0
        %773 = vmatprep.subr.mxu0 0.0
        %774 = vmatpush1.msra.mxu0 0.0
        %775 = vmatprep.subr.mxu0 0.0
        %776 = vmatpush1.msra.mxu0 0.0
        %777 = vmatprep.subr.mxu0 0.0
        %778 = vmatpush1.msra.mxu0 0.0
        %779 = vmatprep.subr.mxu0 0.0
        %780 = vmatpush1.msra.mxu0 0.0
        %781 = vmatprep.subr.mxu0 0.0
        %782 = vmatpush1.msra.mxu0 0.0
        %783 = vmatprep.subr.mxu0 0.0
        %784 = vmatpush1.msra.mxu0 0.0
        %785 = vmatprep.subr.mxu0 0.0
        %786 = vmatpush1.msra.mxu0 0.0
        %787 = vmatprep.subr.mxu0 0.0
        %788 = vmatpush1.msra.mxu0 0.0
        %789 = vmatprep.subr.mxu0 0.0
        %790 = vmatpush1.msra.mxu0 0.0
        %791 = vmatprep.subr.mxu0 0.0
        %792 = vmatpush1.msra.mxu0 0.0
        %793 = vmatprep.subr.mxu0 0.0
        %794 = vmatpush1.msra.mxu0 0.0
        %795 = vmatprep.subr.mxu0 0.0
        %796 = vmatpush1.msra.mxu0 0.0
        %797 = vmatprep.subr.mxu0 0.0
        %798 = vmatpush1.msra.mxu0 0.0
        %799 = vmatprep.subr.mxu0 0.0
        %800 = vmatpush1.msra.mxu0 0.0
        %801 = vmatprep.subr.mxu0 0.0
        %802 = vmatpush1.msra.mxu0 0.0
        %803 = vmatprep.subr.mxu0 0.0
        %804 = vmatpush1.msra.mxu0 0.0
        %805 = vmatprep.subr.mxu0 0.0
        %806 = vmatpush1.msra.mxu0 0.0
        %807 = vmatprep.subr.mxu0 0.0
        %808 = vmatpush1.msra.mxu0 0.0
        %809 = vmatprep.subr.mxu0 0.0
        %810 = vmatpush1.msra.mxu0 0.0
        %811 = vmatprep.subr.mxu0 0.0
        %812 = vmatpush1.msra.mxu0 0.0
        %813 = vmatprep.subr.mxu0 0.0
        %814 = vmatpush1.msra.mxu0 0.0
        %815 = vmatprep.subr.mxu0 0.0
        %816 = vmatpush1.msra.mxu0 0.0
        %817 = vmatprep.subr.mxu0 0.0
        %818 = vmatpush1.msra.mxu0 0.0
        %819 = vmatprep.subr.mxu0 0.0
        %820 = vmatpush1.msra.mxu0 0.0
        %821 = vmatprep.subr.mxu0 0.0
        %822 = vmatpush1.msra.mxu0 0.0
        %823 = vmatprep.subr.mxu0 0.0
        %824 = vmatpush1.msra.mxu0 0.0
        %825 = vmatprep.mubr.f32.mxu0 0.0
        %826 = vmatmul.mubr.f32.gmra.mrb[0].mxu0 %v759
        %v827 = vpop.f32.mrb[0].mxu0
        %v828 = vadd.f32 0.0, %v827
        %v829 = vpop.f32.mrb[0].mxu0
        %830 = vdwg.mxu0
        %831 = vrot.lane.b32.xlu0 %v506, 120
        %v832 = vpop.permute.xlu0 %831
        %833 = vrot.lane.b32.xlu0 %v583, 120
        %v834 = vpop.permute.xlu0 %833
        %v835 = vsel %vm668, %v832, 0
        %v837 = vsel %vm668, %v834, 0
        %839 = vmatprep.subr.mxu0 0.0
        %840 = vmatpush1.xpose.msra.mxu0 %v837
        %841 = vmatprep.subr.mxu0 0.0
        %842 = vmatpush1.xpose.msra.mxu0 0.0
        %843 = vmatprep.subr.mxu0 0.0
        %844 = vmatpush1.xpose.msra.mxu0 0.0
        %845 = vmatprep.subr.mxu0 0.0
        %846 = vmatpush1.xpose.msra.mxu0 0.0
        %847 = vmatprep.subr.mxu0 0.0
        %848 = vmatpush1.xpose.msra.mxu0 0.0
        %849 = vmatprep.subr.mxu0 0.0
        %850 = vmatpush1.xpose.msra.mxu0 0.0
        %851 = vmatprep.subr.mxu0 0.0
        %852 = vmatpush1.xpose.msra.mxu0 0.0
        %853 = vmatprep.subr.mxu0 0.0
        %854 = vmatpush1.xpose.msra.mxu0 0.0
        %855 = vmatprep.subr.mxu0 0.0
        %856 = vmatpush1.xpose.msra.mxu0 0.0
        %857 = vmatprep.subr.mxu0 0.0
        %858 = vmatpush1.xpose.msra.mxu0 0.0
        %859 = vmatprep.subr.mxu0 0.0
        %860 = vmatpush1.xpose.msra.mxu0 0.0
        %861 = vmatprep.subr.mxu0 0.0
        %862 = vmatpush1.xpose.msra.mxu0 0.0
        %863 = vmatprep.subr.mxu0 0.0
        %864 = vmatpush1.xpose.msra.mxu0 0.0
        %865 = vmatprep.subr.mxu0 0.0
        %866 = vmatpush1.xpose.msra.mxu0 0.0
        %867 = vmatprep.subr.mxu0 0.0
        %868 = vmatpush1.xpose.msra.mxu0 0.0
        %869 = vmatprep.subr.mxu0 0.0
        %870 = vmatpush1.xpose.msra.mxu0 0.0
        %871 = vmatprep.subr.mxu0 0.0
        %872 = vmatpush1.xpose.msra.mxu0 0.0
        %873 = vmatprep.subr.mxu0 0.0
        %874 = vmatpush1.xpose.msra.mxu0 0.0
        %875 = vmatprep.subr.mxu0 0.0
        %876 = vmatpush1.xpose.msra.mxu0 0.0
        %877 = vmatprep.subr.mxu0 0.0
        %878 = vmatpush1.xpose.msra.mxu0 0.0
        %879 = vmatprep.subr.mxu0 0.0
        %880 = vmatpush1.xpose.msra.mxu0 0.0
        %881 = vmatprep.subr.mxu0 0.0
        %882 = vmatpush1.xpose.msra.mxu0 0.0
        %883 = vmatprep.subr.mxu0 0.0
        %884 = vmatpush1.xpose.msra.mxu0 0.0
        %885 = vmatprep.subr.mxu0 0.0
        %886 = vmatpush1.xpose.msra.mxu0 0.0
        %887 = vmatprep.subr.mxu0 0.0
        %888 = vmatpush1.xpose.msra.mxu0 0.0
        %889 = vmatprep.subr.mxu0 0.0
        %890 = vmatpush1.xpose.msra.mxu0 0.0
        %891 = vmatprep.subr.mxu0 0.0
        %892 = vmatpush1.xpose.msra.mxu0 0.0
        %893 = vmatprep.subr.mxu0 0.0
        %894 = vmatpush1.xpose.msra.mxu0 0.0
        %895 = vmatprep.subr.mxu0 0.0
        %896 = vmatpush1.xpose.msra.mxu0 0.0
        %897 = vmatprep.subr.mxu0 0.0
        %898 = vmatpush1.xpose.msra.mxu0 0.0
        %899 = vmatprep.subr.mxu0 0.0
        %900 = vmatpush1.xpose.msra.mxu0 0.0
        %901 = vmatprep.subr.mxu0 0.0
        %902 = vmatpush1.xpose.msra.mxu0 0.0
        %903 = vmatprep.mubr.f32.mxu0 0.0
        %904 = vmatmul.mubr.f32.gmra.mrb[0].mxu0 %v835
        %v905 = vpop.f32.mrb[0].mxu0
        %v906 = vadd.f32 0.0, %v905
        %v907 = vpop.f32.mrb[0].mxu0
        %908 = vdwg.mxu0
        %v909 = vsel %vm667, %v906, -1e+10
        %v910 = vmul.f32 %v909, 0.35355338
        %v911 = vsel %vm668, %v910, -inf
        %912 = vmax.xlane.f32.xlu0 %v911
        %v913 = vpop.xlane.xlu0 %912
        %v914 = vsub.f32 %v910, %v913
        %v915 = vmul.f32 %v914, 1.442695
        %v916 = vpow.pop %v915
        %v917 = vsel %vm668, %v916, 0.0
        %918 = vadd.xlane.f32.xlu0 %v917
        %v919 = vpop.xlane.xlu0 %918
        %v920 = vrcp.pop %v919
        %v921 = vmul.f32 %v916, %v920
        %923 = vrot.lane.b32.xlu0 %v657, 120
        %v924 = vpop.permute.xlu0 %923
        %v927 = vsel %vm668, %v921, 0
        %929 = vmatprep.subr.mxu0 0.0
        %930 = vmatpush1.msra.mxu0 %v924
        %931 = vmatprep.subr.mxu0 0.0
        %932 = vmatpush1.msra.mxu0 0.0
        %933 = vmatprep.subr.mxu0 0.0
        %934 = vmatpush1.msra.mxu0 0.0
        %935 = vmatprep.subr.mxu0 0.0
        %936 = vmatpush1.msra.mxu0 0.0
        %937 = vmatprep.subr.mxu0 0.0
        %938 = vmatpush1.msra.mxu0 0.0
        %939 = vmatprep.subr.mxu0 0.0
        %940 = vmatpush1.msra.mxu0 0.0
        %941 = vmatprep.subr.mxu0 0.0
        %942 = vmatpush1.msra.mxu0 0.0
        %943 = vmatprep.subr.mxu0 0.0
        %944 = vmatpush1.msra.mxu0 0.0
        %945 = vmatprep.subr.mxu0 0.0
        %946 = vmatpush1.msra.mxu0 0.0
        %947 = vmatprep.subr.mxu0 0.0
        %948 = vmatpush1.msra.mxu0 0.0
        %949 = vmatprep.subr.mxu0 0.0
        %950 = vmatpush1.msra.mxu0 0.0
        %951 = vmatprep.subr.mxu0 0.0
        %952 = vmatpush1.msra.mxu0 0.0
        %953 = vmatprep.subr.mxu0 0.0
        %954 = vmatpush1.msra.mxu0 0.0
        %955 = vmatprep.subr.mxu0 0.0
        %956 = vmatpush1.msra.mxu0 0.0
        %957 = vmatprep.subr.mxu0 0.0
        %958 = vmatpush1.msra.mxu0 0.0
        %959 = vmatprep.subr.mxu0 0.0
        %960 = vmatpush1.msra.mxu0 0.0
        %961 = vmatprep.subr.mxu0 0.0
        %962 = vmatpush1.msra.mxu0 0.0
        %963 = vmatprep.subr.mxu0 0.0
        %964 = vmatpush1.msra.mxu0 0.0
        %965 = vmatprep.subr.mxu0 0.0
        %966 = vmatpush1.msra.mxu0 0.0
        %967 = vmatprep.subr.mxu0 0.0
        %968 = vmatpush1.msra.mxu0 0.0
        %969 = vmatprep.subr.mxu0 0.0
        %970 = vmatpush1.msra.mxu0 0.0
        %971 = vmatprep.subr.mxu0 0.0
        %972 = vmatpush1.msra.mxu0 0.0
        %973 = vmatprep.subr.mxu0 0.0
        %974 = vmatpush1.msra.mxu0 0.0
        %975 = vmatprep.subr.mxu0 0.0
        %976 = vmatpush1.msra.mxu0 0.0
        %977 = vmatprep.subr.mxu0 0.0
        %978 = vmatpush1.msra.mxu0 0.0
        %979 = vmatprep.subr.mxu0 0.0
        %980 = vmatpush1.msra.mxu0 0.0
        %981 = vmatprep.subr.mxu0 0.0
        %982 = vmatpush1.msra.mxu0 0.0
        %983 = vmatprep.subr.mxu0 0.0
        %984 = vmatpush1.msra.mxu0 0.0
        %985 = vmatprep.subr.mxu0 0.0
        %986 = vmatpush1.msra.mxu0 0.0
        %987 = vmatprep.subr.mxu0 0.0
        %988 = vmatpush1.msra.mxu0 0.0
        %989 = vmatprep.subr.mxu0 0.0
        %990 = vmatpush1.msra.mxu0 0.0
        %991 = vmatprep.subr.mxu0 0.0
        %992 = vmatpush1.msra.mxu0 0.0
        %993 = vmatprep.mubr.f32.mxu0 0.0
        %994 = vmatmul.mubr.f32.gmra.mrb[0].mxu0 %v927
        %v995 = vpop.f32.mrb[0].mxu0
        %v996 = vadd.f32 0.0, %v995
        %v997 = vpop.f32.mrb[0].mxu0
        %998 = vdwg.mxu0
        %999 = vrot.lane.b32.xlu0 %v506, 112
        %v1000 = vpop.permute.xlu0 %999
        %1001 = vrot.lane.b32.xlu0 %v583, 112
        %v1002 = vpop.permute.xlu0 %1001
        %v1003 = vsel %vm668, %v1000, 0
        %v1005 = vsel %vm668, %v1002, 0
        %1007 = vmatprep.subr.mxu0 0.0
        %1008 = vmatpush1.xpose.msra.mxu0 %v1005
        %1009 = vmatprep.subr.mxu0 0.0
        %1010 = vmatpush1.xpose.msra.mxu0 0.0
        %1011 = vmatprep.subr.mxu0 0.0
        %1012 = vmatpush1.xpose.msra.mxu0 0.0
        %1013 = vmatprep.subr.mxu0 0.0
        %1014 = vmatpush1.xpose.msra.mxu0 0.0
        %1015 = vmatprep.subr.mxu0 0.0
        %1016 = vmatpush1.xpose.msra.mxu0 0.0
        %1017 = vmatprep.subr.mxu0 0.0
        %1018 = vmatpush1.xpose.msra.mxu0 0.0
        %1019 = vmatprep.subr.mxu0 0.0
        %1020 = vmatpush1.xpose.msra.mxu0 0.0
        %1021 = vmatprep.subr.mxu0 0.0
        %1022 = vmatpush1.xpose.msra.mxu0 0.0
        %1023 = vmatprep.subr.mxu0 0.0
        %1024 = vmatpush1.xpose.msra.mxu0 0.0
        %1025 = vmatprep.subr.mxu0 0.0
        %1026 = vmatpush1.xpose.msra.mxu0 0.0
        %1027 = vmatprep.subr.mxu0 0.0
        %1028 = vmatpush1.xpose.msra.mxu0 0.0
        %1029 = vmatprep.subr.mxu0 0.0
        %1030 = vmatpush1.xpose.msra.mxu0 0.0
        %1031 = vmatprep.subr.mxu0 0.0
        %1032 = vmatpush1.xpose.msra.mxu0 0.0
        %1033 = vmatprep.subr.mxu0 0.0
        %1034 = vmatpush1.xpose.msra.mxu0 0.0
        %1035 = vmatprep.subr.mxu0 0.0
        %1036 = vmatpush1.xpose.msra.mxu0 0.0
        %1037 = vmatprep.subr.mxu0 0.0
        %1038 = vmatpush1.xpose.msra.mxu0 0.0
        %1039 = vmatprep.subr.mxu0 0.0
        %1040 = vmatpush1.xpose.msra.mxu0 0.0
        %1041 = vmatprep.subr.mxu0 0.0
        %1042 = vmatpush1.xpose.msra.mxu0 0.0
        %1043 = vmatprep.subr.mxu0 0.0
        %1044 = vmatpush1.xpose.msra.mxu0 0.0
        %1045 = vmatprep.subr.mxu0 0.0
        %1046 = vmatpush1.xpose.msra.mxu0 0.0
        %1047 = vmatprep.subr.mxu0 0.0
        %1048 = vmatpush1.xpose.msra.mxu0 0.0
        %1049 = vmatprep.subr.mxu0 0.0
        %1050 = vmatpush1.xpose.msra.mxu0 0.0
        %1051 = vmatprep.subr.mxu0 0.0
        %1052 = vmatpush1.xpose.msra.mxu0 0.0
        %1053 = vmatprep.subr.mxu0 0.0
        %1054 = vmatpush1.xpose.msra.mxu0 0.0
        %1055 = vmatprep.subr.mxu0 0.0
        %1056 = vmatpush1.xpose.msra.mxu0 0.0
        %1057 = vmatprep.subr.mxu0 0.0
        %1058 = vmatpush1.xpose.msra.mxu0 0.0
        %1059 = vmatprep.subr.mxu0 0.0
        %1060 = vmatpush1.xpose.msra.mxu0 0.0
        %1061 = vmatprep.subr.mxu0 0.0
        %1062 = vmatpush1.xpose.msra.mxu0 0.0
        %1063 = vmatprep.subr.mxu0 0.0
        %1064 = vmatpush1.xpose.msra.mxu0 0.0
        %1065 = vmatprep.subr.mxu0 0.0
        %1066 = vmatpush1.xpose.msra.mxu0 0.0
        %1067 = vmatprep.subr.mxu0 0.0
        %1068 = vmatpush1.xpose.msra.mxu0 0.0
        %1069 = vmatprep.subr.mxu0 0.0
        %1070 = vmatpush1.xpose.msra.mxu0 0.0
        %1071 = vmatprep.mubr.f32.mxu0 0.0
        %1072 = vmatmul.mubr.f32.gmra.mrb[0].mxu0 %v1003
        %v1073 = vpop.f32.mrb[0].mxu0
        %v1074 = vadd.f32 0.0, %v1073
        %v1075 = vpop.f32.mrb[0].mxu0
        %1076 = vdwg.mxu0
        %v1077 = vsel %vm667, %v1074, -1e+10
        %v1078 = vmul.f32 %v1077, 0.35355338
        %v1079 = vsel %vm668, %v1078, -inf
        %1080 = vmax.xlane.f32.xlu0 %v1079
        %v1081 = vpop.xlane.xlu0 %1080
        %v1082 = vsub.f32 %v1078, %v1081
        %v1083 = vmul.f32 %v1082, 1.442695
        %v1084 = vpow.pop %v1083
        %v1085 = vsel %vm668, %v1084, 0.0
        %1086 = vadd.xlane.f32.xlu0 %v1085
        %v1087 = vpop.xlane.xlu0 %1086
        %v1088 = vrcp.pop %v1087
        %v1089 = vmul.f32 %v1084, %v1088
        %1090 = vrot.lane.b32.xlu0 %v657, 112
        %v1091 = vpop.permute.xlu0 %1090
        %v1094 = vsel %vm668, %v1089, 0
        %1096 = vmatprep.subr.mxu0 0.0
        %1097 = vmatpush1.msra.mxu0 %v1091
        %1098 = vmatprep.subr.mxu0 0.0
        %1099 = vmatpush1.msra.mxu0 0.0
        %1100 = vmatprep.subr.mxu0 0.0
        %1101 = vmatpush1.msra.mxu0 0.0
        %1102 = vmatprep.subr.mxu0 0.0
        %1103 = vmatpush1.msra.mxu0 0.0
        %1104 = vmatprep.subr.mxu0 0.0
        %1105 = vmatpush1.msra.mxu0 0.0
        %1106 = vmatprep.subr.mxu0 0.0
        %1107 = vmatpush1.msra.mxu0 0.0
        %1108 = vmatprep.subr.mxu0 0.0
        %1109 = vmatpush1.msra.mxu0 0.0
        %1110 = vmatprep.subr.mxu0 0.0
        %1111 = vmatpush1.msra.mxu0 0.0
        %1112 = vmatprep.subr.mxu0 0.0
        %1113 = vmatpush1.msra.mxu0 0.0
        %1114 = vmatprep.subr.mxu0 0.0
        %1115 = vmatpush1.msra.mxu0 0.0
        %1116 = vmatprep.subr.mxu0 0.0
        %1117 = vmatpush1.msra.mxu0 0.0
        %1118 = vmatprep.subr.mxu0 0.0
        %1119 = vmatpush1.msra.mxu0 0.0
        %1120 = vmatprep.subr.mxu0 0.0
        %1121 = vmatpush1.msra.mxu0 0.0
        %1122 = vmatprep.subr.mxu0 0.0
        %1123 = vmatpush1.msra.mxu0 0.0
        %1124 = vmatprep.subr.mxu0 0.0
        %1125 = vmatpush1.msra.mxu0 0.0
        %1126 = vmatprep.subr.mxu0 0.0
        %1127 = vmatpush1.msra.mxu0 0.0
        %1128 = vmatprep.subr.mxu0 0.0
        %1129 = vmatpush1.msra.mxu0 0.0
        %1130 = vmatprep.subr.mxu0 0.0
        %1131 = vmatpush1.msra.mxu0 0.0
        %1132 = vmatprep.subr.mxu0 0.0
        %1133 = vmatpush1.msra.mxu0 0.0
        %1134 = vmatprep.subr.mxu0 0.0
        %1135 = vmatpush1.msra.mxu0 0.0
        %1136 = vmatprep.subr.mxu0 0.0
        %1137 = vmatpush1.msra.mxu0 0.0
        %1138 = vmatprep.subr.mxu0 0.0
        %1139 = vmatpush1.msra.mxu0 0.0
        %1140 = vmatprep.subr.mxu0 0.0
        %1141 = vmatpush1.msra.mxu0 0.0
        %1142 = vmatprep.subr.mxu0 0.0
        %1143 = vmatpush1.msra.mxu0 0.0
        %1144 = vmatprep.subr.mxu0 0.0
        %1145 = vmatpush1.msra.mxu0 0.0
        %1146 = vmatprep.subr.mxu0 0.0
        %1147 = vmatpush1.msra.mxu0 0.0
        %1148 = vmatprep.subr.mxu0 0.0
        %1149 = vmatpush1.msra.mxu0 0.0
        %1150 = vmatprep.subr.mxu0 0.0
        %1151 = vmatpush1.msra.mxu0 0.0
        %1152 = vmatprep.subr.mxu0 0.0
        %1153 = vmatpush1.msra.mxu0 0.0
        %1154 = vmatprep.subr.mxu0 0.0
        %1155 = vmatpush1.msra.mxu0 0.0
        %1156 = vmatprep.subr.mxu0 0.0
        %1157 = vmatpush1.msra.mxu0 0.0
        %1158 = vmatprep.subr.mxu0 0.0
        %1159 = vmatpush1.msra.mxu0 0.0
        %1160 = vmatprep.mubr.f32.mxu0 0.0
        %1161 = vmatmul.mubr.f32.gmra.mrb[0].mxu0 %v1094
        %v1162 = vpop.f32.mrb[0].mxu0
        %v1163 = vadd.f32 0.0, %v1162
        %v1164 = vpop.f32.mrb[0].mxu0
        %1165 = vdwg.mxu0
        %1166 = vrot.lane.b32.xlu0 %v506, 104
        %v1167 = vpop.permute.xlu0 %1166
        %1168 = vrot.lane.b32.xlu0 %v583, 104
        %v1169 = vpop.permute.xlu0 %1168
        %v1170 = vsel %vm668, %v1167, 0
        %v1172 = vsel %vm668, %v1169, 0
        %1174 = vmatprep.subr.mxu0 0.0
        %1175 = vmatpush1.xpose.msra.mxu0 %v1172
        %1176 = vmatprep.subr.mxu0 0.0
        %1177 = vmatpush1.xpose.msra.mxu0 0.0
        %1178 = vmatprep.subr.mxu0 0.0
        %1179 = vmatpush1.xpose.msra.mxu0 0.0
        %1180 = vmatprep.subr.mxu0 0.0
        %1181 = vmatpush1.xpose.msra.mxu0 0.0
        %1182 = vmatprep.subr.mxu0 0.0
        %1183 = vmatpush1.xpose.msra.mxu0 0.0
        %1184 = vmatprep.subr.mxu0 0.0
        %1185 = vmatpush1.xpose.msra.mxu0 0.0
        %1186 = vmatprep.subr.mxu0 0.0
        %1187 = vmatpush1.xpose.msra.mxu0 0.0
        %1188 = vmatprep.subr.mxu0 0.0
        %1189 = vmatpush1.xpose.msra.mxu0 0.0
        %1190 = vmatprep.subr.mxu0 0.0
        %1191 = vmatpush1.xpose.msra.mxu0 0.0
        %1192 = vmatprep.subr.mxu0 0.0
        %1193 = vmatpush1.xpose.msra.mxu0 0.0
        %1194 = vmatprep.subr.mxu0 0.0
        %1195 = vmatpush1.xpose.msra.mxu0 0.0
        %1196 = vmatprep.subr.mxu0 0.0
        %1197 = vmatpush1.xpose.msra.mxu0 0.0
        %1198 = vmatprep.subr.mxu0 0.0
        %1199 = vmatpush1.xpose.msra.mxu0 0.0
        %1200 = vmatprep.subr.mxu0 0.0
        %1201 = vmatpush1.xpose.msra.mxu0 0.0
        %1202 = vmatprep.subr.mxu0 0.0
        %1203 = vmatpush1.xpose.msra.mxu0 0.0
        %1204 = vmatprep.subr.mxu0 0.0
        %1205 = vmatpush1.xpose.msra.mxu0 0.0
        %1206 = vmatprep.subr.mxu0 0.0
        %1207 = vmatpush1.xpose.msra.mxu0 0.0
        %1208 = vmatprep.subr.mxu0 0.0
        %1209 = vmatpush1.xpose.msra.mxu0 0.0
        %1210 = vmatprep.subr.mxu0 0.0
        %1211 = vmatpush1.xpose.msra.mxu0 0.0
        %1212 = vmatprep.subr.mxu0 0.0
        %1213 = vmatpush1.xpose.msra.mxu0 0.0
        %1214 = vmatprep.subr.mxu0 0.0
        %1215 = vmatpush1.xpose.msra.mxu0 0.0
        %1216 = vmatprep.subr.mxu0 0.0
        %1217 = vmatpush1.xpose.msra.mxu0 0.0
        %1218 = vmatprep.subr.mxu0 0.0
        %1219 = vmatpush1.xpose.msra.mxu0 0.0
        %1220 = vmatprep.subr.mxu0 0.0
        %1221 = vmatpush1.xpose.msra.mxu0 0.0
        %1222 = vmatprep.subr.mxu0 0.0
        %1223 = vmatpush1.xpose.msra.mxu0 0.0
        %1224 = vmatprep.subr.mxu0 0.0
        %1225 = vmatpush1.xpose.msra.mxu0 0.0
        %1226 = vmatprep.subr.mxu0 0.0
        %1227 = vmatpush1.xpose.msra.mxu0 0.0
        %1228 = vmatprep.subr.mxu0 0.0
        %1229 = vmatpush1.xpose.msra.mxu0 0.0
        %1230 = vmatprep.subr.mxu0 0.0
        %1231 = vmatpush1.xpose.msra.mxu0 0.0
        %1232 = vmatprep.subr.mxu0 0.0
        %1233 = vmatpush1.xpose.msra.mxu0 0.0
        %1234 = vmatprep.subr.mxu0 0.0
        %1235 = vmatpush1.xpose.msra.mxu0 0.0
        %1236 = vmatprep.subr.mxu0 0.0
        %1237 = vmatpush1.xpose.msra.mxu0 0.0
        %1238 = vmatprep.mubr.f32.mxu0 0.0
        %1239 = vmatmul.mubr.f32.gmra.mrb[0].mxu0 %v1170
        %v1240 = vpop.f32.mrb[0].mxu0
        %v1241 = vadd.f32 0.0, %v1240
        %v1242 = vpop.f32.mrb[0].mxu0
        %1243 = vdwg.mxu0
        %v1244 = vsel %vm667, %v1241, -1e+10
        %v1245 = vmul.f32 %v1244, 0.35355338
        %v1246 = vsel %vm668, %v1245, -inf
        %1247 = vmax.xlane.f32.xlu0 %v1246
        %v1248 = vpop.xlane.xlu0 %1247
        %v1249 = vsub.f32 %v1245, %v1248
        %v1250 = vmul.f32 %v1249, 1.442695
        %v1251 = vpow.pop %v1250
        %v1252 = vsel %vm668, %v1251, 0.0
        %1253 = vadd.xlane.f32.xlu0 %v1252
        %v1254 = vpop.xlane.xlu0 %1253
        %v1255 = vrcp.pop %v1254
        %v1256 = vmul.f32 %v1251, %v1255
        %1257 = vrot.lane.b32.xlu0 %v657, 104
        %v1258 = vpop.permute.xlu0 %1257
        %v1261 = vsel %vm668, %v1256, 0
        %1263 = vmatprep.subr.mxu0 0.0
        %1264 = vmatpush1.msra.mxu0 %v1258
        %1265 = vmatprep.subr.mxu0 0.0
        %1266 = vmatpush1.msra.mxu0 0.0
        %1267 = vmatprep.subr.mxu0 0.0
        %1268 = vmatpush1.msra.mxu0 0.0
        %1269 = vmatprep.subr.mxu0 0.0
        %1270 = vmatpush1.msra.mxu0 0.0
        %1271 = vmatprep.subr.mxu0 0.0
        %1272 = vmatpush1.msra.mxu0 0.0
        %1273 = vmatprep.subr.mxu0 0.0
        %1274 = vmatpush1.msra.mxu0 0.0
        %1275 = vmatprep.subr.mxu0 0.0
        %1276 = vmatpush1.msra.mxu0 0.0
        %1277 = vmatprep.subr.mxu0 0.0
        %1278 = vmatpush1.msra.mxu0 0.0
        %1279 = vmatprep.subr.mxu0 0.0
        %1280 = vmatpush1.msra.mxu0 0.0
        %1281 = vmatprep.subr.mxu0 0.0
        %1282 = vmatpush1.msra.mxu0 0.0
        %1283 = vmatprep.subr.mxu0 0.0
        %1284 = vmatpush1.msra.mxu0 0.0
        %1285 = vmatprep.subr.mxu0 0.0
        %1286 = vmatpush1.msra.mxu0 0.0
        %1287 = vmatprep.subr.mxu0 0.0
        %1288 = vmatpush1.msra.mxu0 0.0
        %1289 = vmatprep.subr.mxu0 0.0
        %1290 = vmatpush1.msra.mxu0 0.0
        %1291 = vmatprep.subr.mxu0 0.0
        %1292 = vmatpush1.msra.mxu0 0.0
        %1293 = vmatprep.subr.mxu0 0.0
        %1294 = vmatpush1.msra.mxu0 0.0
        %1295 = vmatprep.subr.mxu0 0.0
        %1296 = vmatpush1.msra.mxu0 0.0
        %1297 = vmatprep.subr.mxu0 0.0
        %1298 = vmatpush1.msra.mxu0 0.0
        %1299 = vmatprep.subr.mxu0 0.0
        %1300 = vmatpush1.msra.mxu0 0.0
        %1301 = vmatprep.subr.mxu0 0.0
        %1302 = vmatpush1.msra.mxu0 0.0
        %1303 = vmatprep.subr.mxu0 0.0
        %1304 = vmatpush1.msra.mxu0 0.0
        %1305 = vmatprep.subr.mxu0 0.0
        %1306 = vmatpush1.msra.mxu0 0.0
        %1307 = vmatprep.subr.mxu0 0.0
        %1308 = vmatpush1.msra.mxu0 0.0
        %1309 = vmatprep.subr.mxu0 0.0
        %1310 = vmatpush1.msra.mxu0 0.0
        %1311 = vmatprep.subr.mxu0 0.0
        %1312 = vmatpush1.msra.mxu0 0.0
        %1313 = vmatprep.subr.mxu0 0.0
        %1314 = vmatpush1.msra.mxu0 0.0
        %1315 = vmatprep.subr.mxu0 0.0
        %1316 = vmatpush1.msra.mxu0 0.0
        %1317 = vmatprep.subr.mxu0 0.0
        %1318 = vmatpush1.msra.mxu0 0.0
        %1319 = vmatprep.subr.mxu0 0.0
        %1320 = vmatpush1.msra.mxu0 0.0
        %1321 = vmatprep.subr.mxu0 0.0
        %1322 = vmatpush1.msra.mxu0 0.0
        %1323 = vmatprep.subr.mxu0 0.0
        %1324 = vmatpush1.msra.mxu0 0.0
        %1325 = vmatprep.subr.mxu0 0.0
        %1326 = vmatpush1.msra.mxu0 0.0
        %1327 = vmatprep.mubr.f32.mxu0 0.0
        %1328 = vmatmul.mubr.f32.gmra.mrb[0].mxu0 %v1261
        %v1329 = vpop.f32.mrb[0].mxu0
        %v1330 = vadd.f32 0.0, %v1329
        %v1331 = vpop.f32.mrb[0].mxu0
        %1332 = vdwg.mxu0
        %1334 = vrot.lane.b32.xlu0 %v996, 8
        %v1335 = vpop.permute.xlu0 %1334
        %1338 = vrot.lane.b32.xlu0 %v1163, 16
        %v1339 = vpop.permute.xlu0 %1338
        %1342 = vrot.lane.b32.xlu0 %v1330, 24
        %v1343 = vpop.permute.xlu0 %1342
        %v1345 = vsel %vm668, %v828, %v1335
        %vm1346 = vcmask 130048
        %v1347 = vsel %vm1346, %v1345, %v1339
        %vm1348 = vcmask 195584
        %v1349 = vsel %vm1348, %v1347, %v1343
        %v1350 = vld [vmem:[%s5] sm:$0xff]
        %v1351 = vld [vmem:[%s5 + $0x8] sm:$0xff]
        %v1352 = vld [vmem:[%s5 + $0x10] sm:$0xff]
        %v1353 = vld [vmem:[%s5 + $0x18] sm:$0xff]
        %v1355 = vsel %vm435, %v1349, 0
        %1357 = vmatprep.subr.mxu0 0.0
        %1358 = vmatpush1.msra.mxu0 %v1350
        %1359 = vmatprep.subr.mxu0 0.0
        %1360 = vmatpush1.msra.mxu0 %v1351
        %1361 = vmatprep.subr.mxu0 0.0
        %1362 = vmatpush1.msra.mxu0 %v1352
        %1363 = vmatprep.subr.mxu0 0.0
        %1364 = vmatpush1.msra.mxu0 %v1353
        %1365 = vmatprep.subr.mxu0 0.0
        %1366 = vmatpush1.msra.mxu0 0.0
        %1367 = vmatprep.subr.mxu0 0.0
        %1368 = vmatpush1.msra.mxu0 0.0
        %1369 = vmatprep.subr.mxu0 0.0
        %1370 = vmatpush1.msra.mxu0 0.0
        %1371 = vmatprep.subr.mxu0 0.0
        %1372 = vmatpush1.msra.mxu0 0.0
        %1373 = vmatprep.subr.mxu0 0.0
        %1374 = vmatpush1.msra.mxu0 0.0
        %1375 = vmatprep.subr.mxu0 0.0
        %1376 = vmatpush1.msra.mxu0 0.0
        %1377 = vmatprep.subr.mxu0 0.0
        %1378 = vmatpush1.msra.mxu0 0.0
        %1379 = vmatprep.subr.mxu0 0.0
        %1380 = vmatpush1.msra.mxu0 0.0
        %1381 = vmatprep.subr.mxu0 0.0
        %1382 = vmatpush1.msra.mxu0 0.0
        %1383 = vmatprep.subr.mxu0 0.0
        %1384 = vmatpush1.msra.mxu0 0.0
        %1385 = vmatprep.subr.mxu0 0.0
        %1386 = vmatpush1.msra.mxu0 0.0
        %1387 = vmatprep.subr.mxu0 0.0
        %1388 = vmatpush1.msra.mxu0 0.0
        %1389 = vmatprep.subr.mxu0 0.0
        %1390 = vmatpush1.msra.mxu0 0.0
        %1391 = vmatprep.subr.mxu0 0.0
        %1392 = vmatpush1.msra.mxu0 0.0
        %1393 = vmatprep.subr.mxu0 0.0
        %1394 = vmatpush1.msra.mxu0 0.0
        %1395 = vmatprep.subr.mxu0 0.0
        %1396 = vmatpush1.msra.mxu0 0.0
        %1397 = vmatprep.subr.mxu0 0.0
        %1398 = vmatpush1.msra.mxu0 0.0
        %1399 = vmatprep.subr.mxu0 0.0
        %1400 = vmatpush1.msra.mxu0 0.0
        %1401 = vmatprep.subr.mxu0 0.0
        %1402 = vmatpush1.msra.mxu0 0.0
        %1403 = vmatprep.subr.mxu0 0.0
        %1404 = vmatpush1.msra.mxu0 0.0
        %1405 = vmatprep.subr.mxu0 0.0
        %1406 = vmatpush1.msra.mxu0 0.0
        %1407 = vmatprep.subr.mxu0 0.0
        %1408 = vmatpush1.msra.mxu0 0.0
        %1409 = vmatprep.subr.mxu0 0.0
        %1410 = vmatpush1.msra.mxu0 0.0
        %1411 = vmatprep.subr.mxu0 0.0
        %1412 = vmatpush1.msra.mxu0 0.0
        %1413 = vmatprep.subr.mxu0 0.0
        %1414 = vmatpush1.msra.mxu0 0.0
        %1415 = vmatprep.subr.mxu0 0.0
        %1416 = vmatpush1.msra.mxu0 0.0
        %1417 = vmatprep.subr.mxu0 0.0
        %1418 = vmatpush1.msra.mxu0 0.0
        %1419 = vmatprep.subr.mxu0 0.0
        %1420 = vmatpush1.msra.mxu0 0.0
        %1421 = vmatprep.mubr.f32.mxu0 0.0
        %1422 = vmatmul.mubr.f32.gmra.mrb[0].mxu0 %v1355
        %v1423 = vpop.f32.mrb[0].mxu0
        %v1424 = vadd.f32 0.0, %v1423
        %v1425 = vpop.f32.mrb[0].mxu0
        %1426 = vdwg.mxu0
        %v1427 = vadd.f32 %v429, %v1424
        %v1428 = vld [vmem:[%s6] sm:$0xff]
        %v1429 = vld [vmem:[%s6 + $0x8] sm:$0xff]
        %v1430 = vld [vmem:[%s6 + $0x10] sm:$0xff]
        %v1431 = vld [vmem:[%s6 + $0x18] sm:$0xff]
        %v1432 = vld [vmem:[%s7] sm:$0x1]
        %v1434 = vlaneseq
        %v1435 = vshrl.u32 %v1434, 7
        %v1436 = vsub.s32 0, %v1435
        %v1437 = vrot.slane %v1432, %v1436
        %v1440 = vsel %vm435, %v1427, 0
        %1442 = vmatprep.subr.mxu0 0.0
        %1443 = vmatpush1.msra.mxu0 %v1428
        %1444 = vmatprep.subr.mxu0 0.0
        %1445 = vmatpush1.msra.mxu0 %v1429
        %1446 = vmatprep.subr.mxu0 0.0
        %1447 = vmatpush1.msra.mxu0 %v1430
        %1448 = vmatprep.subr.mxu0 0.0
        %1449 = vmatpush1.msra.mxu0 %v1431
        %1450 = vmatprep.subr.mxu0 0.0
        %1451 = vmatpush1.msra.mxu0 0.0
        %1452 = vmatprep.subr.mxu0 0.0
        %1453 = vmatpush1.msra.mxu0 0.0
        %1454 = vmatprep.subr.mxu0 0.0
        %1455 = vmatpush1.msra.mxu0 0.0
        %1456 = vmatprep.subr.mxu0 0.0
        %1457 = vmatpush1.msra.mxu0 0.0
        %1458 = vmatprep.subr.mxu0 0.0
        %1459 = vmatpush1.msra.mxu0 0.0
        %1460 = vmatprep.subr.mxu0 0.0
        %1461 = vmatpush1.msra.mxu0 0.0
        %1462 = vmatprep.subr.mxu0 0.0
        %1463 = vmatpush1.msra.mxu0 0.0
        %1464 = vmatprep.subr.mxu0 0.0
        %1465 = vmatpush1.msra.mxu0 0.0
        %1466 = vmatprep.subr.mxu0 0.0
        %1467 = vmatpush1.msra.mxu0 0.0
        %1468 = vmatprep.subr.mxu0 0.0
        %1469 = vmatpush1.msra.mxu0 0.0
        %1470 = vmatprep.subr.mxu0 0.0
        %1471 = vmatpush1.msra.mxu0 0.0
        %1472 = vmatprep.subr.mxu0 0.0
        %1473 = vmatpush1.msra.mxu0 0.0
        %1474 = vmatprep.subr.mxu0 0.0
        %1475 = vmatpush1.msra.mxu0 0.0
        %1476 = vmatprep.subr.mxu0 0.0
        %1477 = vmatpush1.msra.mxu0 0.0
        %1478 = vmatprep.subr.mxu0 0.0
        %1479 = vmatpush1.msra.mxu0 0.0
        %1480 = vmatprep.subr.mxu0 0.0
        %1481 = vmatpush1.msra.mxu0 0.0
        %1482 = vmatprep.subr.mxu0 0.0
        %1483 = vmatpush1.msra.mxu0 0.0
        %1484 = vmatprep.subr.mxu0 0.0
        %1485 = vmatpush1.msra.mxu0 0.0
        %1486 = vmatprep.subr.mxu0 0.0
        %1487 = vmatpush1.msra.mxu0 0.0
        %1488 = vmatprep.subr.mxu0 0.0
        %1489 = vmatpush1.msra.mxu0 0.0
        %1490 = vmatprep.subr.mxu0 0.0
        %1491 = vmatpush1.msra.mxu0 0.0
        %1492 = vmatprep.subr.mxu0 0.0
        %1493 = vmatpush1.msra.mxu0 0.0
        %1494 = vmatprep.subr.mxu0 0.0
        %1495 = vmatpush1.msra.mxu0 0.0
        %1496 = vmatprep.subr.mxu0 0.0
        %1497 = vmatpush1.msra.mxu0 0.0
        %1498 = vmatprep.subr.mxu0 0.0
        %1499 = vmatpush1.msra.mxu0 0.0
        %1500 = vmatprep.subr.mxu0 0.0
        %1501 = vmatpush1.msra.mxu0 0.0
        %1502 = vmatprep.subr.mxu0 0.0
        %1503 = vmatpush1.msra.mxu0 0.0
        %1504 = vmatprep.subr.mxu0 0.0
        %1505 = vmatpush1.msra.mxu0 0.0
        %1506 = vmatprep.mubr.f32.mxu0 0.0
        %1507 = vmatmul.mubr.f32.gmra.mrb[0].mxu0 %v1440
        %v1508 = vpop.f32.mrb[0].mxu0
        %v1509 = vadd.f32 %v1437, %v1508
        %v1510 = vpop.f32.mrb[0].mxu0
        %1511 = vdwg.mxu0
        %v1512 = vmax.f32 %v1509, 0.0
        %v1513 = vld [vmem:[%s8] sm:$0xff]
        %v1514 = vld [vmem:[%s8 + $0x8] sm:$0xff]
        %v1515 = vld [vmem:[%s8 + $0x10] sm:$0xff]
        %v1516 = vld [vmem:[%s8 + $0x18] sm:$0xff]
        %v1517 = vld [vmem:[%s8 + $0x20] sm:$0xff]
        %v1518 = vld [vmem:[%s8 + $0x28] sm:$0xff]
        %v1519 = vld [vmem:[%s8 + $0x30] sm:$0xff]
        %v1520 = vld [vmem:[%s8 + $0x38] sm:$0xff]
        %v1521 = vld [vmem:[%s8 + $0x40] sm:$0xff]
        %v1522 = vld [vmem:[%s8 + $0x48] sm:$0xff]
        %v1523 = vld [vmem:[%s8 + $0x50] sm:$0xff]
        %v1524 = vld [vmem:[%s8 + $0x58] sm:$0xff]
        %v1525 = vld [vmem:[%s8 + $0x60] sm:$0xff]
        %v1526 = vld [vmem:[%s8 + $0x68] sm:$0xff]
        %v1527 = vld [vmem:[%s8 + $0x70] sm:$0xff]
        %v1528 = vld [vmem:[%s8 + $0x78] sm:$0xff]
        %v1529 = vld [vmem:[%s9] sm:$0x1]
        %v1531 = vlaneseq
        %v1532 = vshrl.u32 %v1531, 7
        %v1533 = vsub.s32 0, %v1532
        %v1534 = vrot.slane %v1529, %v1533
        %1536 = vmatprep.subr.mxu0 0.0
        %1537 = vmatpush1.msra.mxu0 %v1513
        %1538 = vmatprep.subr.mxu0 0.0
        %1539 = vmatpush1.msra.mxu0 %v1514
        %1540 = vmatprep.subr.mxu0 0.0
        %1541 = vmatpush1.msra.mxu0 %v1515
        %1542 = vmatprep.subr.mxu0 0.0
        %1543 = vmatpush1.msra.mxu0 %v1516
        %1544 = vmatprep.subr.mxu0 0.0
        %1545 = vmatpush1.msra.mxu0 %v1517
        %1546 = vmatprep.subr.mxu0 0.0
        %1547 = vmatpush1.msra.mxu0 %v1518
        %1548 = vmatprep.subr.mxu0 0.0
        %1549 = vmatpush1.msra.mxu0 %v1519
        %1550 = vmatprep.subr.mxu0 0.0
        %1551 = vmatpush1.msra.mxu0 %v1520
        %1552 = vmatprep.subr.mxu0 0.0
        %1553 = vmatpush1.msra.mxu0 %v1521
        %1554 = vmatprep.subr.mxu0 0.0
        %1555 = vmatpush1.msra.mxu0 %v1522
        %1556 = vmatprep.subr.mxu0 0.0
        %1557 = vmatpush1.msra.mxu0 %v1523
        %1558 = vmatprep.subr.mxu0 0.0
        %1559 = vmatpush1.msra.mxu0 %v1524
        %1560 = vmatprep.subr.mxu0 0.0
        %1561 = vmatpush1.msra.mxu0 %v1525
        %1562 = vmatprep.subr.mxu0 0.0
        %1563 = vmatpush1.msra.mxu0 %v1526
        %1564 = vmatprep.subr.mxu0 0.0
        %1565 = vmatpush1.msra.mxu0 %v1527
        %1566 = vmatprep.subr.mxu0 0.0
        %1567 = vmatpush1.msra.mxu0 %v1528
        %1568 = vmatprep.subr.mxu0 0.0
        %1569 = vmatpush1.msra.mxu0 0.0
        %1570 = vmatprep.subr.mxu0 0.0
        %1571 = vmatpush1.msra.mxu0 0.0
        %1572 = vmatprep.subr.mxu0 0.0
        %1573 = vmatpush1.msra.mxu0 0.0
        %1574 = vmatprep.subr.mxu0 0.0
        %1575 = vmatpush1.msra.mxu0 0.0
        %1576 = vmatprep.subr.mxu0 0.0
        %1577 = vmatpush1.msra.mxu0 0.0
        %1578 = vmatprep.subr.mxu0 0.0
        %1579 = vmatpush1.msra.mxu0 0.0
        %1580 = vmatprep.subr.mxu0 0.0
        %1581 = vmatpush1.msra.mxu0 0.0
        %1582 = vmatprep.subr.mxu0 0.0
        %1583 = vmatpush1.msra.mxu0 0.0
        %1584 = vmatprep.subr.mxu0 0.0
        %1585 = vmatpush1.msra.mxu0 0.0
        %1586 = vmatprep.subr.mxu0 0.0
        %1587 = vmatpush1.msra.mxu0 0.0
        %1588 = vmatprep.subr.mxu0 0.0
        %1589 = vmatpush1.msra.mxu0 0.0
        %1590 = vmatprep.subr.mxu0 0.0
        %1591 = vmatpush1.msra.mxu0 0.0
        %1592 = vmatprep.subr.mxu0 0.0
        %1593 = vmatpush1.msra.mxu0 0.0
        %1594 = vmatprep.subr.mxu0 0.0
        %1595 = vmatpush1.msra.mxu0 0.0
        %1596 = vmatprep.subr.mxu0 0.0
        %1597 = vmatpush1.msra.mxu0 0.0
        %1598 = vmatprep.subr.mxu0 0.0
        %1599 = vmatpush1.msra.mxu0 0.0
        %1600 = vmatprep.mubr.f32.mxu0 0.0
        %1601 = vmatmul.mubr.f32.gmra.mrb[0].mxu0 %v1512
        %v1602 = vpop.f32.mrb[0].mxu0
        %v1603 = vadd.f32 %v1534, %v1602
        %v1604 = vpop.f32.mrb[0].mxu0
        %1605 = vdwg.mxu0
        %v1606 = vadd.f32 %v1427, %v1603
        %1607 = vst.msk [vmem:[%s428] sm:$0xff] %vm435, %v1606
        %s1608 = sand.u32 %s274, 1
        %s1609 = scalar_lea.sflag [#allocation4], %s1608
        %s1610 = sand.u32 %s274, 1
        %s1611 = smul.addr %s1610, 8
        %s1612 = scalar_lea.vmem [#allocation7], %s1611
        // Predicated region
        $region69: #{tpu_custom_call.1} parent=59 // pred_check
          %p1613 = pneg %p284
        $region70: #{tpu_custom_call.1} parent=59 // pred_check_branch
          %1615 = sbr.rel (%p1613) target = $region72
        $region71: #{tpu_custom_call.1} parent=59 // pred_region
          %s1617 = ssub.s32 128, 128
          %1618 = vsyncadd %s1609, %s1617
          %s1619 = sadd.s32 %s35, %s34
          %s1620 = smul.addr %s1619, 128
          %s1621 = scalar_lea.hbm %s10, %s1620
          %s1623 = sshll.u32 %s1612, 4
          %s1624 = int_to_ptr.vmem [resolvable:$true] %s1623
          %1626 = dma.vmem_to_hbm [thread:$0]  %s1624, 128, %s1621, %s1609
        $region72: #{tpu_custom_call.1} parent=59 // pred_fallthru
          _
      $region60: #{tpu_custom_call.1} parent=5 // pred_fallthru
        _
      %p1627 = scmp.le.s32.totalorder 2, %s25
      // Predicated region
      $region73: #{tpu_custom_call.1} parent=5 // pred_check
        %p1628 = pneg %p1627
      $region74: #{tpu_custom_call.1} parent=5 // pred_check_branch
        %1630 = sbr.rel (%p1628) target = $region76
      $region75: #{tpu_custom_call.1} parent=5 // pred_region
        %s1631 = ssub.s32 %s25, 2
        // Predicated region
        $region77: #{tpu_custom_call.1} parent=75 // pred_check
          %p1632 = pneg %p290
        $region78: #{tpu_custom_call.1} parent=75 // pred_check_branch
          %1634 = sbr.rel (%p1632) target = $region80
        $region79: #{tpu_custom_call.1} parent=75 // pred_region
          %s1635 = sand.u32 %s275, 1
          %s1636 = scalar_lea.sflag [#allocation4], %s1635
          %s1637 = sand.u32 %s275, 1
          %s1638 = smul.addr %s1637, 8
          %s1639 = scalar_lea.vmem [#allocation7], %s1638
          %1640 = dma.done %s1636, 128
        $region80: #{tpu_custom_call.1} parent=75 // pred_fallthru
          _
      $region76: #{tpu_custom_call.1} parent=5 // pred_fallthru
        _
    $region6: #{tpu_custom_call.1} parent=1 // loop_footer
      %s29 = sadd.s32 1, %s25
    $region7: #{tpu_custom_call.1} parent=1 // loop_footer_branch
      %24 = sbr.rel target = $region3
    $region8: #{tpu_custom_call.1} parent=1 // loop_exit
      _
    %1641 = vsyncpa [#allocation3], 1
    %s1642 = scalar_lea.sflag [#allocation3], 1
    %1643 = vsyncpa %s1642, 1
    %1644 = vsyncpa [#allocation6], 1
    %s1645 = scalar_lea.sflag [#allocation6], 1
    %1646 = vsyncpa %s1645, 1
    %1647 = vsyncpa [#allocation4], 1
    %s1648 = scalar_lea.sflag [#allocation4], 1
    %1649 = vsyncpa %s1648, 1

</llo_original>
